<compile_context>
chip_gen: v7x
topology: tpu7x:2x2x1
jax: 0.10.0
libtpu: 0.0.40
codegen_flags: <defaults>
</compile_context>

<pallas_src>
import functools

import jax
import jax.numpy as jnp
import numpy as np
from jax.experimental import pallas as pl
from jax.experimental.pallas import tpu as pltpu

NORM_PPF_0_75 = 0.6745

LANE = 128
MAX_BLOCK_ROWS = 512        # 512 x 1024 f32 = 2 MiB per array per block
TARGET_BLOCKS = 4           # >= 4 grid steps: pipelining + dual-TC on v7x


def activ_init_basis(nbits: int) -> jnp.ndarray:
    return jnp.asarray(
        [NORM_PPF_0_75 * 2.0 / (2 ** nbits - 1) * 2.0 ** i for i in range(nbits)],
        dtype=jnp.float32,
    )


def make_encodings(nbits: int) -> jnp.ndarray:
    bitvecs = np.unpackbits(
        np.arange(2 ** nbits, dtype=np.uint8).reshape(-1, 1), axis=1
    )[:, -nbits:]
    return jnp.asarray(bitvecs.astype(np.float32) * 2.0 - 1.0)


def _cdiv(a: int, b: int) -> int:
    return -(-a // b)


def _round_up(a: int, b: int) -> int:
    return _cdiv(a, b) * b


# ----------------------------------------------------------------------------
# Pallas kernel.
#
# Quantization rule (matches the PyTorch loop exactly, incl. tie behavior):
#   level(x) = first i with x <= thres_i, else last level,
# implemented by sweeping thresholds from the top so lower levels overwrite.
# Optional per-block stats (for the least-squares refit):
#   row 0, lane i      : Sum over block of [x > thres_i]        (i < L-1)
#   row 1, lane i      : Sum over block of x * [x > thres_i]    (i < L-1)
#   row 1, lane L-1    : Sum over block of x
# ----------------------------------------------------------------------------
def _lq_kernel(qlv_ref, thres_ref, x_ref, *out_refs,
               num_levels, lpad, want_wq, want_stats,
               mask_partial, valid_rows_last):
    L = num_levels
    x = x_ref[...].astype(jnp.float32)
    br, W = x.shape

    if want_stats and mask_partial:
        # Final (partial) block: rows past the array end hold garbage from the
        # double-buffered VMEM slot.  Zero them so they behave like exact
        # zeros; the JAX side subtracts their contribution exactly.
        row = jax.lax.broadcasted_iota(jnp.int32, (br, W), 0)
        limit = jnp.where(pl.program_id(0) == pl.num_programs(0) - 1,
                          valid_rows_last, br)
        x = jnp.where(row < limit, x, 0.0)

    wq = None
    if want_wq:
        wq = jnp.full_like(x, qlv_ref[L - 1])        # default: highest level
    cnts = [None] * (L - 1)
    sxs = [None] * (L - 1)
    for i in range(L - 2, -1, -1):
        above = x > thres_ref[i]
        if want_wq:
            wq = jnp.where(above, wq, qlv_ref[i])    # exact q-level values
        if want_stats:
            cnts[i] = jnp.sum(jnp.where(above, 1.0, 0.0))
            sxs[i] = jnp.sum(jnp.where(above, x, 0.0))

    k = 0
    if want_wq:
        out_refs[k][...] = wq.astype(out_refs[k].dtype)
        k += 1
    if want_stats:
        total = jnp.sum(x)
        srow = jax.lax.broadcasted_iota(jnp.int32, (2, lpad), 0)
        lane = jax.lax.broadcasted_iota(jnp.int32, (2, lpad), 1)
        stats = jnp.zeros((2, lpad), jnp.float32)
        for i in range(L - 1):
            stats = stats + jnp.where((srow == 0) & (lane == i), cnts[i], 0.0)
            stats = stats + jnp.where((srow == 1) & (lane == i), sxs[i], 0.0)
        stats = stats + jnp.where((srow == 1) & (lane == (L - 1)), total, 0.0)
        out_refs[k][...] = stats[None]


def lq_quantize_pallas(x_flat, qlv_sorted, *, want_wq=True, want_stats=False):
    """Quantize a flat vector to the sorted q-levels.

    Returns (wq_or_None, counts_or_None, sums_or_None) where counts[l] is the
    number of elements assigned to sorted level l and sums[l] is the sum of x
    over those elements.
    """
    assert want_wq or want_stats
    n = x_flat.shape[0]
    L = qlv_sorted.shape[0]
    thres = (qlv_sorted[:-1] + qlv_sorted[1:]) * 0.5

    # ---- lane-dense 2-D view: widest W (multiple of 128) that divides n ----
    W = LANE
    for cand in (1024, 512, 256):
        if n % cand == 0:
            W = cand
            break
    if n % W == 0:
        n_pad, xp = n, x_flat                       # no copy
    else:
        # TODO(synk): ragged n (not a multiple of 128) still pays a <=127-elem
        # jnp.pad copy and a wq[:n] slice; rare for real activation shapes.
        n_pad = _round_up(n, W)
        xp = jnp.pad(x_flat, (0, n_pad - n))
    rows = n_pad // W
    x2 = xp.reshape(rows, W)

    # ---- block rows: aim for >= TARGET_BLOCKS grid steps, cap at 2 MiB ----
    br = min(MAX_BLOCK_ROWS, _round_up(_cdiv(rows, TARGET_BLOCKS), 8))
    if br >= rows:
        br = rows                                   # tiny tensor: one block
    nblocks = _cdiv(rows, br)
    valid_rows_last = rows - (nblocks - 1) * br
    mask_partial = valid_rows_last != br            # final block is partial
    lpad = max(LANE, _round_up(L, LANE))

    out_shape, out_specs = [], []
    if want_wq:
        out_shape.append(jax.ShapeDtypeStruct((rows, W), x_flat.dtype))
        out_specs.append(pl.BlockSpec((br, W), lambda i: (i, 0)))
    if want_stats:
        out_shape.append(jax.ShapeDtypeStruct((nblocks, 2, lpad), jnp.float32))
        out_specs.append(pl.BlockSpec((1, 2, lpad), lambda i: (i, 0, 0)))

    kernel = functools.partial(
        _lq_kernel, num_levels=L, lpad=lpad,
        want_wq=want_wq, want_stats=want_stats,
        mask_partial=mask_partial, valid_rows_last=valid_rows_last)

    itemsize = jnp.dtype(x_flat.dtype).itemsize
    bytes_accessed = n_pad * itemsize * (2 if want_wq else 1)
    if want_stats:
        bytes_accessed += nblocks * 2 * lpad * 4
    flops = n_pad * ((L - 1) * 2 + ((L - 1) * 3 + 1 if want_stats else 0))
    cost = pl.CostEstimate(flops=int(flops), transcendentals=0,
                           bytes_accessed=int(bytes_accessed))

    outs = pl.pallas_call(
        kernel,
        out_shape=tuple(out_shape),
        grid_spec=pltpu.PrefetchScalarGridSpec(
            num_scalar_prefetch=0,
            grid=(nblocks,),
            in_specs=[
                pl.BlockSpec(memory_space=pltpu.MemorySpace.SMEM),  # q-levels
                pl.BlockSpec(memory_space=pltpu.MemorySpace.SMEM),  # thresholds
                pl.BlockSpec((br, W), lambda i: (i, 0)),            # x block
            ],
            out_specs=out_specs,
        ),
        compiler_params=pltpu.CompilerParams(
            dimension_semantics=("parallel",)),
        cost_estimate=cost,
    )(qlv_sorted, thres, x2)

    if not isinstance(outs, (tuple, list)):
        outs = (outs,)

    k = 0
    wq = None
    if want_wq:
        wq = outs[k].reshape(-1)
        if n_pad != n:
            wq = wq[:n]
        k += 1

    counts = sums = None
    if want_stats:
        st = outs[k]                                 # (nblocks, 2, lpad)
        # Per-block counts are exact f32 integers (<= 2^19); reduce in int32
        # so they stay exact for any realistic activation size.
        cum_cnt = jnp.sum(st[:, 0, :L - 1].astype(jnp.int32), axis=0)
        sum_red = jnp.sum(st[:, 1, :], axis=0)       # f32 value sums
        cum_sum = sum_red[:L - 1]
        total_x = sum_red[L - 1]
        # Elements beyond the real n (garbage rows of the partial final block
        # zeroed in-kernel + ragged-pad zeros) look like exact zeros and add
        # [0 > thres_i] to each cumulative count; subtract them exactly.
        extra = nblocks * br * W - n
        if extra:
            cum_cnt = cum_cnt - extra * (thres < 0.0).astype(jnp.int32)
        zero_i = jnp.zeros((1,), jnp.int32)
        n_i = jnp.full((1,), n, jnp.int32)
        counts = (jnp.concatenate([n_i, cum_cnt])
                  - jnp.concatenate([cum_cnt, zero_i])).astype(jnp.float32)
        zero_f = jnp.zeros((1,), jnp.float32)
        sums = (jnp.concatenate([total_x[None], cum_sum])
                - jnp.concatenate([cum_sum, zero_f]))
    return wq, counts, sums


# ----------------------------------------------------------------------------
# LQActiv forward (glue around the kernel).
# ----------------------------------------------------------------------------
def lqactiv_forward(x, basis, encodings, *, training=True, q_T=1, q_alpha=0.9):
    x_flat = x.reshape(-1)

    def sorted_levels(v):
        qlv = encodings @ v
        order = jnp.argsort(qlv)
        return qlv[order], encodings[order]

    if training:
        v = basis
        wq = None
        for t in range(q_T):
            qlv_s, enc_s = sorted_levels(v)
            last = (t == q_T - 1)
            # Intermediate iterations only need the refit stats (no wq store).
            wq_t, counts, sums = lq_quantize_pallas(
                x_flat, qlv_s, want_wq=last, want_stats=True)
            if last:
                wq = wq_t
            # a_mat = wb.T @ wb = sum_l count_l * enc_l enc_l^T
            # b_vec = wb.T @ x  = sum_l sum_x_l  * enc_l
            a_mat = enc_s.T @ (counts[:, None] * enc_s)
            b_vec = enc_s.T @ sums
            v = jnp.linalg.solve(a_mat, b_vec)
        new_basis = q_alpha * basis + (1.0 - q_alpha) * v
    else:
        qlv_s, _ = sorted_levels(basis)
        wq, _, _ = lq_quantize_pallas(
            x_flat, qlv_s, want_wq=True, want_stats=False)
        new_basis = basis

    return wq.reshape(x.shape), new_basis


# ----------------------------------------------------------------------------
# Pure-JAX reference (mirrors the PyTorch forward) for correctness checks.
# ----------------------------------------------------------------------------
def _forward_ref(x, basis, encodings, q_T, q_alpha, training):
    xf = x.reshape(-1)

    def quantize(v):
        qlv = encodings @ v
        order = jnp.argsort(qlv)
        qs, es = qlv[order], encodings[order]
        thres = (qs[:-1] + qs[1:]) * 0.5
        idx = jnp.sum((xf[:, None] > thres[None, :]).astype(jnp.int32), axis=1)
        return qs[idx], es[idx]

    if training:
        v = basis
        wq = None
        for _ in range(q_T):
            wq, wb = quantize(v)
            v = jnp.linalg.solve(wb.T @ wb, wb.T @ xf)
        nb = q_alpha * basis + (1.0 - q_alpha) * v
    else:
        wq, _ = quantize(basis)
        nb = basis
    return wq.reshape(x.shape), nb


if __name__ == "__main__":
    NBITS = 2
    Q_T = 1
    Q_ALPHA = 0.9

    basis = activ_init_basis(NBITS)            # deterministic buffer init
    encodings = make_encodings(NBITS)

    key = jax.random.PRNGKey(0)
    x = jax.random.normal(key, (2, 4, 16, 16), dtype=jnp.float32)  # NCHW

    fwd_train = jax.jit(functools.partial(
        lqactiv_forward, training=True, q_T=Q_T, q_alpha=Q_ALPHA))
    q_x, new_basis = fwd_train(x, basis, encodings)
    jax.block_until_ready((q_x, new_basis))

    fwd_eval = jax.jit(functools.partial(
        lqactiv_forward, training=False, q_T=Q_T, q_alpha=Q_ALPHA))
    q_x_eval, basis_eval = fwd_eval(x, basis, encodings)
    jax.block_until_ready((q_x_eval, basis_eval))

    # ---- correctness checks against the pure-JAX reference ----
    ref_q, ref_basis = _forward_ref(x, basis, encodings, Q_T, Q_ALPHA, True)
    np.testing.assert_allclose(np.asarray(q_x), np.asarray(ref_q),
                               rtol=0, atol=0)
    np.testing.assert_allclose(np.asarray(new_basis), np.asarray(ref_basis),
                               rtol=1e-3, atol=1e-5)

    ref_q_eval, _ = _forward_ref(x, basis, encodings, Q_T, Q_ALPHA, False)
    np.testing.assert_allclose(np.asarray(q_x_eval), np.asarray(ref_q_eval),
                               rtol=0, atol=0)
    np.testing.assert_allclose(np.asarray(basis_eval), np.asarray(basis),
                               rtol=0, atol=0)

    assert q_x.shape == x.shape and q_x.dtype == x.dtype
    assert new_basis.shape == basis.shape

    # ---- extra shapes: multi-block grid with a partial final block (masked
    # stats) and a truly ragged size (pad fallback) ----
    for shape in ((2, 4, 36, 36), (1, 3, 7, 7)):
        xs = jax.random.normal(jax.random.PRNGKey(1), shape, dtype=jnp.float32)
        qs, nbs = fwd_train(xs, basis, encodings)
        jax.block_until_ready((qs, nbs))
        rq, rb = _forward_ref(xs, basis, encodings, Q_T, Q_ALPHA, True)
        np.testing.assert_allclose(np.asarray(qs), np.asarray(rq),
                                   rtol=0, atol=0)
        np.testing.assert_allclose(np.asarray(nbs), np.asarray(rb),
                                   rtol=1e-3, atol=1e-5)
        qe, _ = fwd_eval(xs, basis, encodings)
        re_, _ = _forward_ref(xs, basis, encodings, Q_T, Q_ALPHA, False)
        np.testing.assert_allclose(np.asarray(qe), np.asarray(re_),
                                   rtol=0, atol=0)

    print("KERNEL_OK")
</pallas_src>

<mosaic_0001>
module attributes {stable_mosaic.version = 11 : i64} {
  func.func @_lq_kernel(%arg0: i32, %arg1: memref<4xf32, #tpu.memory_space<smem>>, %arg2: memref<3xf32, #tpu.memory_space<smem>>, %arg3: memref<2x1024xf32, #tpu.memory_space<vmem>>, %arg4: memref<2x1024xf32, #tpu.memory_space<vmem>>, %arg5: memref<1x2x128xf32, #tpu.memory_space<vmem>>) attributes {dimension_semantics = [#tpu.dimension_semantics<parallel>], iteration_bounds = array<i64: 1>, scalar_prefetch = 0 : i64, scratch_operands = 0 : i64, tpu.core_type = #tpu.core_type<tc>, window_params = [{transform_indices = @transform_0, window_bounds = array<i64: 4>}, {transform_indices = @transform_1, window_bounds = array<i64: 3>}, {transform_indices = @transform_2, window_bounds = array<i64: 2, 1024>}, {transform_indices = @transform_3, window_bounds = array<i64: 2, 1024>}, {transform_indices = @transform_4, window_bounds = array<i64: 1, 2, 128>}]} {
    %c0 = arith.constant 0 : index
    %c0_0 = arith.constant 0 : index
    %0 = vector.load %arg3[%c0, %c0_0] : memref<2x1024xf32, #tpu.memory_space<vmem>>, vector<2x1024xf32>
    %c3 = arith.constant 3 : index
    %1 = memref.load %arg1[%c3] : memref<4xf32, #tpu.memory_space<smem>>
    %2 = vector.broadcast %1 : f32 to vector<2x1024xf32>
    %c2 = arith.constant 2 : index
    %3 = memref.load %arg2[%c2] : memref<3xf32, #tpu.memory_space<smem>>
    %4 = vector.broadcast %3 : f32 to vector<2x1024xf32>
    %5 = arith.cmpf ogt, %0, %4 : vector<2x1024xf32>
    %c2_1 = arith.constant 2 : index
    %6 = memref.load %arg1[%c2_1] : memref<4xf32, #tpu.memory_space<smem>>
    %7 = vector.broadcast %6 : f32 to vector<2x1024xf32>
    %8 = arith.select %5, %2, %7 : vector<2x1024xi1>, vector<2x1024xf32>
    %cst = arith.constant 1.000000e+00 : f32
    %cst_2 = arith.constant 0.000000e+00 : f32
    %9 = vector.broadcast %cst : f32 to vector<2x1024xf32>
    %10 = vector.broadcast %cst_2 : f32 to vector<2x1024xf32>
    %11 = arith.select %5, %9, %10 : vector<2x1024xi1>, vector<2x1024xf32>
    %12 = vector.shape_cast %11 : vector<2x1024xf32> to vector<1x2x1024xf32>
    %cst_3 = arith.constant dense<0.000000e+00> : vector<1xf32>
    %13 = vector.multi_reduction <add>, %12, %cst_3 [1, 2] : vector<1x2x1024xf32> to vector<1xf32>
    %14 = vector.shape_cast %13 : vector<1xf32> to vector<1x1x1xf32>
    %15 = vector.extract %14[0, 0, 0] : f32 from vector<1x1x1xf32>
    %cst_4 = arith.constant 0.000000e+00 : f32
    %16 = vector.broadcast %cst_4 : f32 to vector<2x1024xf32>
    %17 = arith.select %5, %0, %16 : vector<2x1024xi1>, vector<2x1024xf32>
    %18 = vector.shape_cast %17 : vector<2x1024xf32> to vector<1x2x1024xf32>
    %cst_5 = arith.constant dense<0.000000e+00> : vector<1xf32>
    %19 = vector.multi_reduction <add>, %18, %cst_5 [1, 2] : vector<1x2x1024xf32> to vector<1xf32>
    %20 = vector.shape_cast %19 : vector<1xf32> to vector<1x1x1xf32>
    %21 = vector.extract %20[0, 0, 0] : f32 from vector<1x1x1xf32>
    %c1 = arith.constant 1 : index
    %22 = memref.load %arg2[%c1] : memref<3xf32, #tpu.memory_space<smem>>
    %23 = vector.broadcast %22 : f32 to vector<2x1024xf32>
    %24 = arith.cmpf ogt, %0, %23 : vector<2x1024xf32>
    %c1_6 = arith.constant 1 : index
    %25 = memref.load %arg1[%c1_6] : memref<4xf32, #tpu.memory_space<smem>>
    %26 = vector.broadcast %25 : f32 to vector<2x1024xf32>
    %27 = arith.select %24, %8, %26 : vector<2x1024xi1>, vector<2x1024xf32>
    %cst_7 = arith.constant 1.000000e+00 : f32
    %cst_8 = arith.constant 0.000000e+00 : f32
    %28 = vector.broadcast %cst_7 : f32 to vector<2x1024xf32>
    %29 = vector.broadcast %cst_8 : f32 to vector<2x1024xf32>
    %30 = arith.select %24, %28, %29 : vector<2x1024xi1>, vector<2x1024xf32>
    %31 = vector.shape_cast %30 : vector<2x1024xf32> to vector<1x2x1024xf32>
    %cst_9 = arith.constant dense<0.000000e+00> : vector<1xf32>
    %32 = vector.multi_reduction <add>, %31, %cst_9 [1, 2] : vector<1x2x1024xf32> to vector<1xf32>
    %33 = vector.shape_cast %32 : vector<1xf32> to vector<1x1x1xf32>
    %34 = vector.extract %33[0, 0, 0] : f32 from vector<1x1x1xf32>
    %cst_10 = arith.constant 0.000000e+00 : f32
    %35 = vector.broadcast %cst_10 : f32 to vector<2x1024xf32>
    %36 = arith.select %24, %0, %35 : vector<2x1024xi1>, vector<2x1024xf32>
    %37 = vector.shape_cast %36 : vector<2x1024xf32> to vector<1x2x1024xf32>
    %cst_11 = arith.constant dense<0.000000e+00> : vector<1xf32>
    %38 = vector.multi_reduction <add>, %37, %cst_11 [1, 2] : vector<1x2x1024xf32> to vector<1xf32>
    %39 = vector.shape_cast %38 : vector<1xf32> to vector<1x1x1xf32>
    %40 = vector.extract %39[0, 0, 0] : f32 from vector<1x1x1xf32>
    %c0_12 = arith.constant 0 : index
    %41 = memref.load %arg2[%c0_12] : memref<3xf32, #tpu.memory_space<smem>>
    %42 = vector.broadcast %41 : f32 to vector<2x1024xf32>
    %43 = arith.cmpf ogt, %0, %42 : vector<2x1024xf32>
    %c0_13 = arith.constant 0 : index
    %44 = memref.load %arg1[%c0_13] : memref<4xf32, #tpu.memory_space<smem>>
    %45 = vector.broadcast %44 : f32 to vector<2x1024xf32>
    %46 = arith.select %43, %27, %45 : vector<2x1024xi1>, vector<2x1024xf32>
    %cst_14 = arith.constant 1.000000e+00 : f32
    %cst_15 = arith.constant 0.000000e+00 : f32
    %47 = vector.broadcast %cst_14 : f32 to vector<2x1024xf32>
    %48 = vector.broadcast %cst_15 : f32 to vector<2x1024xf32>
    %49 = arith.select %43, %47, %48 : vector<2x1024xi1>, vector<2x1024xf32>
    %50 = vector.shape_cast %49 : vector<2x1024xf32> to vector<1x2x1024xf32>
    %cst_16 = arith.constant dense<0.000000e+00> : vector<1xf32>
    %51 = vector.multi_reduction <add>, %50, %cst_16 [1, 2] : vector<1x2x1024xf32> to vector<1xf32>
    %52 = vector.shape_cast %51 : vector<1xf32> to vector<1x1x1xf32>
    %53 = vector.extract %52[0, 0, 0] : f32 from vector<1x1x1xf32>
    %cst_17 = arith.constant 0.000000e+00 : f32
    %54 = vector.broadcast %cst_17 : f32 to vector<2x1024xf32>
    %55 = arith.select %43, %0, %54 : vector<2x1024xi1>, vector<2x1024xf32>
    %56 = vector.shape_cast %55 : vector<2x1024xf32> to vector<1x2x1024xf32>
    %cst_18 = arith.constant dense<0.000000e+00> : vector<1xf32>
    %57 = vector.multi_reduction <add>, %56, %cst_18 [1, 2] : vector<1x2x1024xf32> to vector<1xf32>
    %58 = vector.shape_cast %57 : vector<1xf32> to vector<1x1x1xf32>
    %59 = vector.extract %58[0, 0, 0] : f32 from vector<1x1x1xf32>
    %c0_19 = arith.constant 0 : index
    %c0_20 = arith.constant 0 : index
    %60 = vector.load %arg4[%c0_19, %c0_20] : memref<2x1024xf32, #tpu.memory_space<vmem>>, vector<2x1024xf32>
    tpu.vector_store %arg4[%c0_19, %c0_20], %46 {strides = array<i32>} : memref<2x1024xf32, #tpu.memory_space<vmem>>, vector<2x1024xf32>,
    %61 = vector.shape_cast %0 : vector<2x1024xf32> to vector<1x2x1024xf32>
    %cst_21 = arith.constant dense<0.000000e+00> : vector<1xf32>
    %62 = vector.multi_reduction <add>, %61, %cst_21 [1, 2] : vector<1x2x1024xf32> to vector<1xf32>
    %63 = vector.shape_cast %62 : vector<1xf32> to vector<1x1x1xf32>
    %64 = vector.extract %63[0, 0, 0] : f32 from vector<1x1x1xf32>
    %65 = tpu.iota {dimensions = array<i32: 0>} : vector<2x128xi32>
    %66 = tpu.iota {dimensions = array<i32: 1>} : vector<2x128xi32>
    %cst_22 = arith.constant 0.000000e+00 : f32
    %67 = vector.broadcast %cst_22 : f32 to vector<2x128xf32>
    %c0_i32 = arith.constant 0 : i32
    %68 = vector.broadcast %c0_i32 : i32 to vector<2x128xi32>
    %69 = arith.cmpi eq, %65, %68 : vector<2x128xi32>
    %c0_i32_23 = arith.constant 0 : i32
    %70 = vector.broadcast %c0_i32_23 : i32 to vector<2x128xi32>
    %71 = arith.cmpi eq, %66, %70 : vector<2x128xi32>
    %72 = arith.andi %69, %71 : vector<2x128xi1>
    %cst_24 = arith.constant 0.000000e+00 : f32
    %73 = vector.broadcast %53 : f32 to vector<2x128xf32>
    %74 = vector.broadcast %cst_24 : f32 to vector<2x128xf32>
    %75 = arith.select %72, %73, %74 : vector<2x128xi1>, vector<2x128xf32>
    %76 = arith.addf %67, %75 : vector<2x128xf32>
    %c1_i32 = arith.constant 1 : i32
    %77 = vector.broadcast %c1_i32 : i32 to vector<2x128xi32>
    %78 = arith.cmpi eq, %65, %77 : vector<2x128xi32>
    %c0_i32_25 = arith.constant 0 : i32
    %79 = vector.broadcast %c0_i32_25 : i32 to vector<2x128xi32>
    %80 = arith.cmpi eq, %66, %79 : vector<2x128xi32>
    %81 = arith.andi %78, %80 : vector<2x128xi1>
    %cst_26 = arith.constant 0.000000e+00 : f32
    %82 = vector.broadcast %59 : f32 to vector<2x128xf32>
    %83 = vector.broadcast %cst_26 : f32 to vector<2x128xf32>
    %84 = arith.select %81, %82, %83 : vector<2x128xi1>, vector<2x128xf32>
    %85 = arith.addf %76, %84 : vector<2x128xf32>
    %c0_i32_27 = arith.constant 0 : i32
    %86 = vector.broadcast %c0_i32_27 : i32 to vector<2x128xi32>
    %87 = arith.cmpi eq, %65, %86 : vector<2x128xi32>
    %c1_i32_28 = arith.constant 1 : i32
    %88 = vector.broadcast %c1_i32_28 : i32 to vector<2x128xi32>
    %89 = arith.cmpi eq, %66, %88 : vector<2x128xi32>
    %90 = arith.andi %87, %89 : vector<2x128xi1>
    %cst_29 = arith.constant 0.000000e+00 : f32
    %91 = vector.broadcast %34 : f32 to vector<2x128xf32>
    %92 = vector.broadcast %cst_29 : f32 to vector<2x128xf32>
    %93 = arith.select %90, %91, %92 : vector<2x128xi1>, vector<2x128xf32>
    %94 = arith.addf %85, %93 : vector<2x128xf32>
    %c1_i32_30 = arith.constant 1 : i32
    %95 = vector.broadcast %c1_i32_30 : i32 to vector<2x128xi32>
    %96 = arith.cmpi eq, %65, %95 : vector<2x128xi32>
    %c1_i32_31 = arith.constant 1 : i32
    %97 = vector.broadcast %c1_i32_31 : i32 to vector<2x128xi32>
    %98 = arith.cmpi eq, %66, %97 : vector<2x128xi32>
    %99 = arith.andi %96, %98 : vector<2x128xi1>
    %cst_32 = arith.constant 0.000000e+00 : f32
    %100 = vector.broadcast %40 : f32 to vector<2x128xf32>
    %101 = vector.broadcast %cst_32 : f32 to vector<2x128xf32>
    %102 = arith.select %99, %100, %101 : vector<2x128xi1>, vector<2x128xf32>
    %103 = arith.addf %94, %102 : vector<2x128xf32>
    %c0_i32_33 = arith.constant 0 : i32
    %104 = vector.broadcast %c0_i32_33 : i32 to vector<2x128xi32>
    %105 = arith.cmpi eq, %65, %104 : vector<2x128xi32>
    %c2_i32 = arith.constant 2 : i32
    %106 = vector.broadcast %c2_i32 : i32 to vector<2x128xi32>
    %107 = arith.cmpi eq, %66, %106 : vector<2x128xi32>
    %108 = arith.andi %105, %107 : vector<2x128xi1>
    %cst_34 = arith.constant 0.000000e+00 : f32
    %109 = vector.broadcast %15 : f32 to vector<2x128xf32>
    %110 = vector.broadcast %cst_34 : f32 to vector<2x128xf32>
    %111 = arith.select %108, %109, %110 : vector<2x128xi1>, vector<2x128xf32>
    %112 = arith.addf %103, %111 : vector<2x128xf32>
    %c1_i32_35 = arith.constant 1 : i32
    %113 = vector.broadcast %c1_i32_35 : i32 to vector<2x128xi32>
    %114 = arith.cmpi eq, %65, %113 : vector<2x128xi32>
    %c2_i32_36 = arith.constant 2 : i32
    %115 = vector.broadcast %c2_i32_36 : i32 to vector<2x128xi32>
    %116 = arith.cmpi eq, %66, %115 : vector<2x128xi32>
    %117 = arith.andi %114, %116 : vector<2x128xi1>
    %cst_37 = arith.constant 0.000000e+00 : f32
    %118 = vector.broadcast %21 : f32 to vector<2x128xf32>
    %119 = vector.broadcast %cst_37 : f32 to vector<2x128xf32>
    %120 = arith.select %117, %118, %119 : vector<2x128xi1>, vector<2x128xf32>
    %121 = arith.addf %112, %120 : vector<2x128xf32>
    %c1_i32_38 = arith.constant 1 : i32
    %122 = vector.broadcast %c1_i32_38 : i32 to vector<2x128xi32>
    %123 = arith.cmpi eq, %65, %122 : vector<2x128xi32>
    %c3_i32 = arith.constant 3 : i32
    %124 = vector.broadcast %c3_i32 : i32 to vector<2x128xi32>
    %125 = arith.cmpi eq, %66, %124 : vector<2x128xi32>
    %126 = arith.andi %123, %125 : vector<2x128xi1>
    %cst_39 = arith.constant 0.000000e+00 : f32
    %127 = vector.broadcast %64 : f32 to vector<2x128xf32>
    %128 = vector.broadcast %cst_39 : f32 to vector<2x128xf32>
    %129 = arith.select %126, %127, %128 : vector<2x128xi1>, vector<2x128xf32>
    %130 = arith.addf %121, %129 : vector<2x128xf32>
    %131 = vector.shape_cast %130 : vector<2x128xf32> to vector<1x2x128xf32>
    %c0_40 = arith.constant 0 : index
    %c0_41 = arith.constant 0 : index
    %c0_42 = arith.constant 0 : index
    %132 = vector.load %arg5[%c0_40, %c0_41, %c0_42] : memref<1x2x128xf32, #tpu.memory_space<vmem>>, vector<1x2x128xf32>
    tpu.vector_store %arg5[%c0_40, %c0_41, %c0_42], %131 {strides = array<i32>} : memref<1x2x128xf32, #tpu.memory_space<vmem>>, vector<1x2x128xf32>,
    return
  }
  func.func @transform_0(%arg0: i32) -> i32 {
    %c0_i32 = arith.constant 0 : i32
    %c0_i32_0 = arith.constant 0 : i32
    return %c0_i32 : i32
  }
  func.func @transform_1(%arg0: i32) -> i32 {
    %c0_i32 = arith.constant 0 : i32
    %c0_i32_0 = arith.constant 0 : i32
    return %c0_i32 : i32
  }
  func.func @transform_2(%arg0: i32) -> (i32, i32) {
    %c0_i32 = arith.constant 0 : i32
    %c0_i32_0 = arith.constant 0 : i32
    return %arg0, %c0_i32 : i32, i32
  }
  func.func @transform_3(%arg0: i32) -> (i32, i32) {
    %c0_i32 = arith.constant 0 : i32
    %c0_i32_0 = arith.constant 0 : i32
    return %arg0, %c0_i32 : i32, i32
  }
  func.func @transform_4(%arg0: i32) -> (i32, i32, i32) {
    %c0_i32 = arith.constant 0 : i32
    %c0_i32_0 = arith.constant 0 : i32
    %c0_i32_1 = arith.constant 0 : i32
    return %arg0, %c0_i32, %c0_i32_0 : i32, i32, i32
  }
}

</mosaic_0001>

<llo_original>
// kernel: custom-call.8
$region0: #{custom-call.8}
  %s0 = inlined_call_operand.vmem [shape: f32[2,2], index: 0, kind: input, shape index: {}]
  %s1 = inlined_call_operand.vmem [shape: f32[2,2], index: 1, kind: output, shape index: {0}]
  %s2 = inlined_call_operand.hbm [shape: s32[2], index: 2, kind: output, shape index: {1}]
  %s3 = inlined_call_operand.vmem [shape: s32[2], index: 3, kind: output, shape index: {2}]
  %4 = xla_tuple %s1, %s2, %s3
  $region1: #{custom-call.8} parent=0
    #allocation0 [shape = 'u8[4096]{0}', space=vmem, size = 0x1000, scoped, tag = 'operand span for operand 0']
    #allocation1 [shape = 'u8[1024]{0}', space=vmem, size = 0x400, scoped, tag = 'packed  for operand 0']
    #allocation2 [shape = 'u8[4096]{0}', space=vmem, size = 0x1000, scoped, tag = 'operand span for operand 1']
    #allocation3 [shape = 'u8[1024]{0}', space=vmem, size = 0x400, scoped, tag = 'packed  for operand 1']
    #allocation4 [shape = 'u8[4096]{0}', space=vmem, size = 0x1000, scoped, tag = 'operand span for operand 2']
    #allocation5 [shape = 'u8[512]{0}', space=vmem, size = 0x400, scoped, tag = 'packed  for operand 2']
    #allocation6 [shape = 's32[1]{0}', space=sflag, size = 0x4, scoped, tag = 'scoped memory for custom-call.8']
    #allocation7 [shape = 'u8[4096]{0}', space=vmem, size = 0x1000, scoped, tag = 'operand span for operand 3']
    #allocation8 [shape = 'u8[512]{0}', space=vmem, size = 0x400, scoped, tag = 'packed  for operand 3']
    #allocation9 [shape = 's32[2,128]{1,0}', space=vmem, size = 0x1000, scoped, tag = 'scratch for permutations']
    %5 = vsyncpa [#allocation6], 0
    %p7 = scmp.gt.s32.totalorder 2, 0
    // Predicated region
    $region2: #{custom-call.8} parent=1 // pred_check
      %p8 = pneg %p7
    $region3: #{custom-call.8} parent=1 // pred_check_branch
      %10 = sbr.rel (%p8) target = $region5
    $region4: #{custom-call.8} parent=1 // pred_region
      %s11 = sshra.s32 2, 3
      %p12 = scmp.gt.s32.totalorder %s11, 0
      // Predicated region
      $region6: #{custom-call.8} parent=4 // pred_check
        %p13 = pneg %p12
      $region7: #{custom-call.8} parent=4 // pred_check_branch
        %15 = sbr.rel (%p13) target = $region9
      $region8: #{custom-call.8} parent=4 // pred_region
        %s16 = ssub.s32 %s11, 1
        %s17 = smul.u32 %s16, 128
        %s18 = sshra.s32 %s17, 4
        %s19 = scalar_lea.vmem %s0, %s18
        %v20 = vld [vmem:[%s0] sm:$0xff]
        // While loop
        $region10: #{custom-call.8} parent=8 // loop_pre_header
          _
        $region11: #{custom-call.8} parent=8 // loop_header
          %s21 = sphi %s0, %s43
          %s22 = sphi [#allocation1], %s44
          %v23 = vphi %v20, %v45
          %s24 = ssub.s32 %s19, 64
          %p25 = scmp.gt.s32.totalorder %s21, %s24
        $region12: #{custom-call.8} parent=8 // loop_header_branch
          %27 = sbr.rel (%p25) target = $region16
        $region13: #{custom-call.8} parent=8 // loop_body
          %28 = vst [vmem:[%s22] sm:$0xff] %v23
          %v29 = vld [vmem:[%s21 + $0x8] sm:$0xff]
          %30 = vst [vmem:[%s22 + $0x8] sm:$0xff] %v29
          %v31 = vld [vmem:[%s21 + $0x10] sm:$0xff]
          %32 = vst [vmem:[%s22 + $0x10] sm:$0xff] %v31
          %v33 = vld [vmem:[%s21 + $0x18] sm:$0xff]
          %34 = vst [vmem:[%s22 + $0x18] sm:$0xff] %v33
          %v35 = vld [vmem:[%s21 + $0x20] sm:$0xff]
          %36 = vst [vmem:[%s22 + $0x20] sm:$0xff] %v35
          %v37 = vld [vmem:[%s21 + $0x28] sm:$0xff]
          %38 = vst [vmem:[%s22 + $0x28] sm:$0xff] %v37
          %v39 = vld [vmem:[%s21 + $0x30] sm:$0xff]
          %40 = vst [vmem:[%s22 + $0x30] sm:$0xff] %v39
          %v41 = vld [vmem:[%s21 + $0x38] sm:$0xff]
          %42 = vst [vmem:[%s22 + $0x38] sm:$0xff] %v41
        $region14: #{custom-call.8} parent=8 // loop_footer
          %s43 = scalar_lea.vmem %s21, 64
          %s44 = scalar_lea.vmem %s22, 64
          %v45 = vld [vmem:[%s21 + $0x40] sm:$0xff]
        $region15: #{custom-call.8} parent=8 // loop_footer_branch
          %46 = sbr.rel target = $region11
        $region16: #{custom-call.8} parent=8 // loop_exit
          _
        // While loop
        $region17: #{custom-call.8} parent=8 // loop_pre_header
          _
        $region18: #{custom-call.8} parent=8 // loop_header
          %s47 = sphi %s21, %s55
          %s48 = sphi %s22, %s56
          %v49 = vphi %v23, %v49
          %p50 = scmp.gt.s32.totalorder %s47, %s19
        $region19: #{custom-call.8} parent=8 // loop_header_branch
          %52 = sbr.rel (%p50) target = $region23
        $region20: #{custom-call.8} parent=8 // loop_body
          %v53 = vld [vmem:[%s47] sm:$0xff]
          %54 = vst [vmem:[%s48] sm:$0xff] %v53
        $region21: #{custom-call.8} parent=8 // loop_footer
          %s55 = scalar_lea.vmem %s47, 8
          %s56 = scalar_lea.vmem %s48, 8
        $region22: #{custom-call.8} parent=8 // loop_footer_branch
          %57 = sbr.rel target = $region18
        $region23: #{custom-call.8} parent=8 // loop_exit
          _
      $region9: #{custom-call.8} parent=4 // pred_fallthru
        _
      %s58 = sand.u32 2, 7
      %s59 = sshllo.u32 0, %s58
      %s60 = smul.u32 %s11, 128
      %s61 = sshra.s32 %s60, 4
      %s62 = scalar_lea.vmem [#allocation1], %s61
      %s63 = smul.u32 %s11, 128
      %s64 = sshra.s32 %s63, 4
      %s65 = scalar_lea.vmem %s0, %s64
      %v66 = vld [vmem:[%s65] sm:%s59]
      %67 = vst [vmem:[%s62] sm:%s59] %v66
    $region5: #{custom-call.8} parent=1 // pred_fallthru
      _
    %s69 = sshllo.u32 0, 2
    %v70 = vld [vmem:[#allocation1] sm:%s69]
    %71 = vst [vmem:[#allocation0] sm:%s69] %v70
    %v72 = vld [vmem:[#allocation0] sm:$0xff]
    %73 = vst [vmem:[#allocation2] sm:$0xff] %v72
    %74 = vst [vmem:[#allocation4] sm:$0x1] 0
    %v75 = vlaneseq
    %v76 = vshrl.u32 %v75, 7
    %v77 = vmov %v76
    %79 = vst [vmem:[#allocation9] sm:$0xff] %v77
    loop: start=0, step=1, limit=2
    $region25: #{custom-call.8} parent=1 // loop_pre_header
      _
    $region26: #{custom-call.8} parent=1 // loop_header
      %s81 = sphi 0, %s85
      %p82 = scmp.ge.s32.totalorder %s81, 2
    $region27: #{custom-call.8} parent=1 // loop_header_branch
      %84 = sbr.rel (%p82) target = $region31
    $region28: #{custom-call.8} parent=1 // loop_body
      %v86 = vstv %s81
      %v87 = vlaneseq
      %v88 = vshrl.u32 %v87, 7
      %v89 = vmov %v88
      %v90 = vld [vmem:[#allocation2] sm:$0xff]
      %v91 = vand.u32 2147483647, %v90
      %v93 = vstv %s81
      %vm94 = vcmp.ge.s32.totalorder %v89, %v93
      %vm95 = vcmp.lt.s32.totalorder %v89, 2
      %vm96 = vmand %vm94, %vm95
      %vm97 = vcmp.lt.f32.partialorder -inf, %v91
      %vm98 = vmand %vm96, %vm97
      %v99 = vsel %vm98, %v89, %v86
      %v100 = vsel %vm98, %v91, -inf
      %v101 = vrot.slane %v100, 1
      %v102 = vrot.slane %v99, 1
      %vm103 = vcmp.ge.f32.partialorder %v101, %v100
      %v104 = vsel %vm103, %v101, %v100
      %v105 = vsel %vm103, %v102, %v99
      %v106 = vrot.slane %v101, 1
      %v107 = vrot.slane %v102, 1
      %vm108 = vcmp.ge.f32.partialorder %v106, %v104
      %v109 = vsel %vm108, %v106, %v104
      %v110 = vsel %vm108, %v107, %v105
      %v111 = vrot.slane %v106, 1
      %v112 = vrot.slane %v107, 1
      %vm113 = vcmp.ge.f32.partialorder %v111, %v109
      %v114 = vsel %vm113, %v111, %v109
      %v115 = vsel %vm113, %v112, %v110
      %v116 = vrot.slane %v111, 1
      %v117 = vrot.slane %v112, 1
      %vm118 = vcmp.ge.f32.partialorder %v116, %v114
      %v119 = vsel %vm118, %v116, %v114
      %v120 = vsel %vm118, %v117, %v115
      %v121 = vrot.slane %v116, 1
      %v122 = vrot.slane %v117, 1
      %vm123 = vcmp.ge.f32.partialorder %v121, %v119
      %v124 = vsel %vm123, %v121, %v119
      %v125 = vsel %vm123, %v122, %v120
      %v126 = vrot.slane %v121, 1
      %v127 = vrot.slane %v122, 1
      %vm128 = vcmp.ge.f32.partialorder %v126, %v124
      %v129 = vsel %vm128, %v126, %v124
      %v130 = vsel %vm128, %v127, %v125
      %v131 = vrot.slane %v126, 1
      %v132 = vrot.slane %v127, 1
      %vm133 = vcmp.ge.f32.partialorder %v131, %v129
      %v134 = vsel %vm133, %v131, %v129
      %v135 = vsel %vm133, %v132, %v130
      %s136 = ssub.s32 128, %s81
      %137 = vrot.lane.b32.xlu0 %v135, %s136
      %v138 = vpop.permute.xlu0 %137
      %s139 = vtos %v138
      %v140 = vstv %s81
      %v141 = vlaneseq
      %v142 = vand.u32 %v141, 127
      %vm143 = vcmp.eq.s32.totalorder %v142, %v140
      %v144 = vstv %s139
      %v145 = vld [vmem:[#allocation4] ss:$0 sm:$0xff]
      %v146 = vsel %vm143, %v144, %v145
      %147 = vst [vmem:[#allocation4] sm:$0x1] %v146
      %s148 = scalar_lea.vmem [#allocation2], %s81
      %s149 = scalar_lea.vmem [#allocation2], %s139
      %v150 = vld [vmem:[%s148] ss:$0 sm:$0xff]
      %v151 = vld [vmem:[%s149] ss:$0 sm:$0xff]
      %152 = vst [vmem:[%s149] sm:$0x1] %v150
      %153 = vst [vmem:[%s148] sm:$0x1] %v151
      %s154 = scalar_lea.vmem [#allocation9], %s81
      %s155 = scalar_lea.vmem [#allocation9], %s139
      %v156 = vld [vmem:[%s154] ss:$0 sm:$0xff]
      %v157 = vld [vmem:[%s155] ss:$0 sm:$0xff]
      %158 = vst [vmem:[%s155] sm:$0x1] %v156
      %159 = vst [vmem:[%s154] sm:$0x1] %v157
      %vm160 = vcmp.ne.f32.partialorder %v151, 0.0
      %vm161 = vmand %vm143, %vm160
      %v162 = vsel %vm161, %v151, 1.0
      %v163 = vlaneseq
      %v164 = vand.u32 %v163, 127
      %v165 = vstv %s81
      %vm166 = vcmp.gt.s32.totalorder %v164, %v165
      %v167 = vsel %vm166, %v151, 0.0
      %v168 = vlaneseq
      %v169 = vshrl.u32 %v168, 7
      %v170 = vmov %v169
      %v171 = vld [vmem:[#allocation2] sm:$0xff]
      %v173 = vstv %s81
      %vm174 = vcmp.gt.s32.totalorder %v170, %v173
      %v175 = vsel %vm174, %v162, 1.0
      %v176 = vrcp.pop %v175
      %v177 = vmul.f32 %v171, %v176
      %vm178 = vmand %vm174, %vm143
      %v179 = vsel %vm178, %v177, 0.0
      %180 = vadd.xlane.f32.xlu0 %v179
      %v181 = vpop.xlane.xlu0 %180
      %v182 = vmul.f32 %v181, %v167
      %v183 = vsub.f32 %v177, %v182
      %184 = vst [vmem:[#allocation2] sm:$0xff] %v183
    $region29: #{custom-call.8} parent=1 // loop_footer
      %s85 = sadd.s32 1, %s81
    $region30: #{custom-call.8} parent=1 // loop_footer_branch
      %80 = sbr.rel target = $region26
    $region31: #{custom-call.8} parent=1 // loop_exit
      _
    %v185 = vld [vmem:[#allocation9] sm:$0xff]
    %s186 = scalar_lea.vmem [#allocation9], 8
    %s187 = scalar_lea.vmem [#allocation9], 16
    %s188 = scalar_lea.vmem [#allocation9], 24
    %s189 = scalar_lea.vmem [#allocation9], 32
    %s190 = scalar_lea.vmem [#allocation9], 40
    %s191 = scalar_lea.vmem [#allocation9], 48
    %s192 = scalar_lea.vmem [#allocation9], 56
    %s193 = scalar_lea.vmem [#allocation9], 64
    %s194 = scalar_lea.vmem [#allocation9], 72
    %s195 = scalar_lea.vmem [#allocation9], 80
    %s196 = scalar_lea.vmem [#allocation9], 88
    %s197 = scalar_lea.vmem [#allocation9], 96
    %s198 = scalar_lea.vmem [#allocation9], 104
    %s199 = scalar_lea.vmem [#allocation9], 112
    %s200 = scalar_lea.vmem [#allocation9], 120
    %201 = vxpose.xlu0.b32.start [1/16] %v185, 128
    %202 = vxpose.xlu0.b32.cont [2/16] 0, 128
    %203 = vxpose.xlu0.b32.cont [3/16] 0, 128
    %204 = vxpose.xlu0.b32.cont [4/16] 0, 128
    %205 = vxpose.xlu0.b32.cont [5/16] 0, 128
    %206 = vxpose.xlu0.b32.cont [6/16] 0, 128
    %207 = vxpose.xlu0.b32.cont [7/16] 0, 128
    %208 = vxpose.xlu0.b32.cont [8/16] 0, 128
    %209 = vxpose.xlu0.b32.cont [9/16] 0, 128
    %210 = vxpose.xlu0.b32.cont [10/16] 0, 128
    %211 = vxpose.xlu0.b32.cont [11/16] 0, 128
    %212 = vxpose.xlu0.b32.cont [12/16] 0, 128
    %213 = vxpose.xlu0.b32.cont [13/16] 0, 128
    %214 = vxpose.xlu0.b32.cont [14/16] 0, 128
    %215 = vxpose.xlu0.b32.cont [15/16] 0, 128
    %216 = vxpose.xlu0.b32.end [16/16] 0, 128
    %v217 = vpop.trf.xlu0
    %v218 = vpop.trf.xlu0
    %v219 = vpop.trf.xlu0
    %v220 = vpop.trf.xlu0
    %v221 = vpop.trf.xlu0
    %v222 = vpop.trf.xlu0
    %v223 = vpop.trf.xlu0
    %v224 = vpop.trf.xlu0
    %v225 = vpop.trf.xlu0
    %v226 = vpop.trf.xlu0
    %v227 = vpop.trf.xlu0
    %v228 = vpop.trf.xlu0
    %v229 = vpop.trf.xlu0
    %v230 = vpop.trf.xlu0
    %v231 = vpop.trf.xlu0
    %v232 = vpop.trf.xlu0
    %233 = vst [vmem:[#allocation7] sm:$0x1] %v217
    %s235 = sshllo.u32 0, 2
    %v237 = vld [vmem:[#allocation2] sm:%s235]
    %s238 = sshllo.u32 0, 2
    %239 = vst [vmem:[#allocation3] sm:%s238] %v237
    %s241 = sshllo.u32 0, 1
    %v243 = vld [vmem:[#allocation4] sm:%s241]
    %s244 = sshllo.u32 0, 1
    %245 = vst [vmem:[#allocation5] sm:%s244] %v243
    %s247 = sshllo.u32 0, 1
    %v249 = vld [vmem:[#allocation7] sm:%s247]
    %s250 = sshllo.u32 0, 1
    %251 = vst [vmem:[#allocation8] sm:%s250] %v249
    %p253 = scmp.gt.s32.totalorder 2, 0
    // Predicated region
    $region32: #{custom-call.8} parent=1 // pred_check
      %p254 = pneg %p253
    $region33: #{custom-call.8} parent=1 // pred_check_branch
      %256 = sbr.rel (%p254) target = $region35
    $region34: #{custom-call.8} parent=1 // pred_region
      %s257 = sshra.s32 2, 3
      %p258 = scmp.gt.s32.totalorder %s257, 0
      // Predicated region
      $region36: #{custom-call.8} parent=34 // pred_check
        %p259 = pneg %p258
      $region37: #{custom-call.8} parent=34 // pred_check_branch
        %261 = sbr.rel (%p259) target = $region39
      $region38: #{custom-call.8} parent=34 // pred_region
        %s262 = ssub.s32 %s257, 1
        %s263 = smul.u32 %s262, 128
        %s264 = sshra.s32 %s263, 4
        %s265 = scalar_lea.vmem [#allocation3], %s264
        %v266 = vld [vmem:[#allocation3] sm:$0xff]
        // While loop
        $region40: #{custom-call.8} parent=38 // loop_pre_header
          _
        $region41: #{custom-call.8} parent=38 // loop_header
          %s267 = sphi [#allocation3], %s289
          %s268 = sphi %s1, %s290
          %v269 = vphi %v266, %v291
          %s270 = ssub.s32 %s265, 64
          %p271 = scmp.gt.s32.totalorder %s267, %s270
        $region42: #{custom-call.8} parent=38 // loop_header_branch
          %273 = sbr.rel (%p271) target = $region46
        $region43: #{custom-call.8} parent=38 // loop_body
          %274 = vst [vmem:[%s268] sm:$0xff] %v269
          %v275 = vld [vmem:[%s267 + $0x8] sm:$0xff]
          %276 = vst [vmem:[%s268 + $0x8] sm:$0xff] %v275
          %v277 = vld [vmem:[%s267 + $0x10] sm:$0xff]
          %278 = vst [vmem:[%s268 + $0x10] sm:$0xff] %v277
          %v279 = vld [vmem:[%s267 + $0x18] sm:$0xff]
          %280 = vst [vmem:[%s268 + $0x18] sm:$0xff] %v279
          %v281 = vld [vmem:[%s267 + $0x20] sm:$0xff]
          %282 = vst [vmem:[%s268 + $0x20] sm:$0xff] %v281
          %v283 = vld [vmem:[%s267 + $0x28] sm:$0xff]
          %284 = vst [vmem:[%s268 + $0x28] sm:$0xff] %v283
          %v285 = vld [vmem:[%s267 + $0x30] sm:$0xff]
          %286 = vst [vmem:[%s268 + $0x30] sm:$0xff] %v285
          %v287 = vld [vmem:[%s267 + $0x38] sm:$0xff]
          %288 = vst [vmem:[%s268 + $0x38] sm:$0xff] %v287
        $region44: #{custom-call.8} parent=38 // loop_footer
          %s289 = scalar_lea.vmem %s267, 64
          %s290 = scalar_lea.vmem %s268, 64
          %v291 = vld [vmem:[%s267 + $0x40] sm:$0xff]
        $region45: #{custom-call.8} parent=38 // loop_footer_branch
          %292 = sbr.rel target = $region41
        $region46: #{custom-call.8} parent=38 // loop_exit
          _
        // While loop
        $region47: #{custom-call.8} parent=38 // loop_pre_header
          _
        $region48: #{custom-call.8} parent=38 // loop_header
          %s293 = sphi %s267, %s301
          %s294 = sphi %s268, %s302
          %v295 = vphi %v269, %v295
          %p296 = scmp.gt.s32.totalorder %s293, %s265
        $region49: #{custom-call.8} parent=38 // loop_header_branch
          %298 = sbr.rel (%p296) target = $region53
        $region50: #{custom-call.8} parent=38 // loop_body
          %v299 = vld [vmem:[%s293] sm:$0xff]
          %300 = vst [vmem:[%s294] sm:$0xff] %v299
        $region51: #{custom-call.8} parent=38 // loop_footer
          %s301 = scalar_lea.vmem %s293, 8
          %s302 = scalar_lea.vmem %s294, 8
        $region52: #{custom-call.8} parent=38 // loop_footer_branch
          %303 = sbr.rel target = $region48
        $region53: #{custom-call.8} parent=38 // loop_exit
          _
      $region39: #{custom-call.8} parent=34 // pred_fallthru
        _
      %s304 = sand.u32 2, 7
      %s305 = sshllo.u32 0, %s304
      %s306 = smul.u32 %s257, 128
      %s307 = sshra.s32 %s306, 4
      %s308 = scalar_lea.vmem %s1, %s307
      %s309 = smul.u32 %s257, 128
      %s310 = sshra.s32 %s309, 4
      %s311 = scalar_lea.vmem [#allocation3], %s310
      %v312 = vld [vmem:[%s311] sm:%s305]
      %313 = vst [vmem:[%s308] sm:%s305] %v312
    $region35: #{custom-call.8} parent=1 // pred_fallthru
      _
    // Predicated region
    $region54: #{custom-call.8} parent=1 // pred_check
      _
    $region55: #{custom-call.8} parent=1 // pred_check_branch
      %315 = sbr.rel (0) target = $region57
    $region56: #{custom-call.8} parent=1 // pred_region
      %s317 = ssub.s32 16, 16
      %318 = vsyncadd [#allocation6], %s317
      %s319 = sshll.u32 [#allocation5], 4
      %s320 = int_to_ptr.vmem [resolvable:$true] %s319
      %322 = dma.vmem_to_hbm [thread:$0]  %s320, 16, %s2, [#allocation6]
    $region57: #{custom-call.8} parent=1 // pred_fallthru
      _
    // Predicated region
    $region58: #{custom-call.8} parent=1 // pred_check
      _
    $region59: #{custom-call.8} parent=1 // pred_check_branch
      %324 = sbr.rel (0) target = $region61
    $region60: #{custom-call.8} parent=1 // pred_region
      %p326 = scmp.gt.s32.totalorder 1, 0
      // Predicated region
      $region62: #{custom-call.8} parent=60 // pred_check
        %p327 = pneg %p326
      $region63: #{custom-call.8} parent=60 // pred_check_branch
        %329 = sbr.rel (%p327) target = $region65
      $region64: #{custom-call.8} parent=60 // pred_region
        %s330 = sshra.s32 1, 3
        %p331 = scmp.gt.s32.totalorder %s330, 0
        // Predicated region
        $region66: #{custom-call.8} parent=64 // pred_check
          %p332 = pneg %p331
        $region67: #{custom-call.8} parent=64 // pred_check_branch
          %334 = sbr.rel (%p332) target = $region69
        $region68: #{custom-call.8} parent=64 // pred_region
          %s335 = ssub.s32 %s330, 1
          %s336 = smul.u32 %s335, 128
          %s337 = sshra.s32 %s336, 4
          %s338 = scalar_lea.vmem [#allocation8], %s337
          %v339 = vld [vmem:[#allocation8] sm:$0xff]
          // While loop
          $region70: #{custom-call.8} parent=68 // loop_pre_header
            _
          $region71: #{custom-call.8} parent=68 // loop_header
            %s340 = sphi [#allocation8], %s362
            %s341 = sphi %s3, %s363
            %v342 = vphi %v339, %v364
            %s343 = ssub.s32 %s338, 64
            %p344 = scmp.gt.s32.totalorder %s340, %s343
          $region72: #{custom-call.8} parent=68 // loop_header_branch
            %346 = sbr.rel (%p344) target = $region76
          $region73: #{custom-call.8} parent=68 // loop_body
            %347 = vst [vmem:[%s341] sm:$0xff] %v342
            %v348 = vld [vmem:[%s340 + $0x8] sm:$0xff]
            %349 = vst [vmem:[%s341 + $0x8] sm:$0xff] %v348
            %v350 = vld [vmem:[%s340 + $0x10] sm:$0xff]
            %351 = vst [vmem:[%s341 + $0x10] sm:$0xff] %v350
            %v352 = vld [vmem:[%s340 + $0x18] sm:$0xff]
            %353 = vst [vmem:[%s341 + $0x18] sm:$0xff] %v352
            %v354 = vld [vmem:[%s340 + $0x20] sm:$0xff]
            %355 = vst [vmem:[%s341 + $0x20] sm:$0xff] %v354
            %v356 = vld [vmem:[%s340 + $0x28] sm:$0xff]
            %357 = vst [vmem:[%s341 + $0x28] sm:$0xff] %v356
            %v358 = vld [vmem:[%s340 + $0x30] sm:$0xff]
            %359 = vst [vmem:[%s341 + $0x30] sm:$0xff] %v358
            %v360 = vld [vmem:[%s340 + $0x38] sm:$0xff]
            %361 = vst [vmem:[%s341 + $0x38] sm:$0xff] %v360
          $region74: #{custom-call.8} parent=68 // loop_footer
            %s362 = scalar_lea.vmem %s340, 64
            %s363 = scalar_lea.vmem %s341, 64
            %v364 = vld [vmem:[%s340 + $0x40] sm:$0xff]
          $region75: #{custom-call.8} parent=68 // loop_footer_branch
            %365 = sbr.rel target = $region71
          $region76: #{custom-call.8} parent=68 // loop_exit
            _
          // While loop
          $region77: #{custom-call.8} parent=68 // loop_pre_header
            _
          $region78: #{custom-call.8} parent=68 // loop_header
            %s366 = sphi %s340, %s374
            %s367 = sphi %s341, %s375
            %v368 = vphi %v342, %v368
            %p369 = scmp.gt.s32.totalorder %s366, %s338
          $region79: #{custom-call.8} parent=68 // loop_header_branch
            %371 = sbr.rel (%p369) target = $region83
          $region80: #{custom-call.8} parent=68 // loop_body
            %v372 = vld [vmem:[%s366] sm:$0xff]
            %373 = vst [vmem:[%s367] sm:$0xff] %v372
          $region81: #{custom-call.8} parent=68 // loop_footer
            %s374 = scalar_lea.vmem %s366, 8
            %s375 = scalar_lea.vmem %s367, 8
          $region82: #{custom-call.8} parent=68 // loop_footer_branch
            %376 = sbr.rel target = $region78
          $region83: #{custom-call.8} parent=68 // loop_exit
            _
        $region69: #{custom-call.8} parent=64 // pred_fallthru
          _
        %s377 = sand.u32 1, 7
        %s378 = sshllo.u32 0, %s377
        %s379 = smul.u32 %s330, 128
        %s380 = sshra.s32 %s379, 4
        %s381 = scalar_lea.vmem %s3, %s380
        %s382 = smul.u32 %s330, 128
        %s383 = sshra.s32 %s382, 4
        %s384 = scalar_lea.vmem [#allocation8], %s383
        %v385 = vld [vmem:[%s384] sm:%s378]
        %386 = vst [vmem:[%s381] sm:%s378] %v385
      $region65: #{custom-call.8} parent=60 // pred_fallthru
        _
    $region61: #{custom-call.8} parent=1 // pred_fallthru
      _
    // Predicated region
    $region84: #{custom-call.8} parent=1 // pred_check
      _
    $region85: #{custom-call.8} parent=1 // pred_check_branch
      %388 = sbr.rel (0) target = $region87
    $region86: #{custom-call.8} parent=1 // pred_region
      %389 = dma.done [#allocation6], 16
    $region87: #{custom-call.8} parent=1 // pred_fallthru
      _
    // Predicated region
    $region88: #{custom-call.8} parent=1 // pred_check
      _
    $region89: #{custom-call.8} parent=1 // pred_check_branch
      %391 = sbr.rel (0) target = $region91
    $region90: #{custom-call.8} parent=1 // pred_region
      _
    $region91: #{custom-call.8} parent=1 // pred_fallthru
      _
    %392 = vsyncpa [#allocation6], 1

// kernel: custom-call.10
$region0: #{custom-call.10}
  %s0 = inlined_call_operand.vmem [shape: f32[1,2,2], index: 0, kind: input, shape index: {}]
  %s1 = inlined_call_operand.vmem [shape: f32[1,2,2], index: 1, kind: output, shape index: {}]
  $region1: #{custom-call.10} parent=0
    #allocation0 [shape = 'u8[4096]{0}', space=vmem, size = 0x1000, scoped, tag = 'operand span for operand 0']
    #allocation1 [shape = 'u8[1024]{0}', space=vmem, size = 0x400, scoped, tag = 'packed  for operand 0']
    #allocation2 [shape = 'u8[4096]{0}', space=vmem, size = 0x1000, scoped, tag = 'operand span for operand 1']
    #allocation3 [shape = 'u8[1024]{0}', space=vmem, size = 0x400, scoped, tag = 'packed  for operand 1']
    #allocation4 [shape = 'f32[2,2]{1,0}', space=vmem, size = 0x1000, scoped, tag = 'rescaled input a']
    // Predicated region
    $region2: #{custom-call.10} parent=1 // pred_check
      _
    $region3: #{custom-call.10} parent=1 // pred_check_branch
      %3 = sbr.rel (0) target = $region5
    $region4: #{custom-call.10} parent=1 // pred_region
      // Predicated region
      $region6: #{custom-call.10} parent=4 // pred_check
        _
      $region7: #{custom-call.10} parent=4 // pred_check_branch
        %5 = sbr.rel target = $region9
      $region8: #{custom-call.10} parent=4 // pred_region
        // Predicated region
        $region21: #{custom-call.10} parent=8 // pred_check
          _
        $region22: #{custom-call.10} parent=8 // pred_check_branch
          %20 = sbr.rel (0) target = $region24
        $region23: #{custom-call.10} parent=8 // pred_region
          loop: start=0, step=1, limit=1
          $region25: #{custom-call.10} parent=23 // loop_pre_header
            _
          $region26: #{custom-call.10} parent=23 // loop_header
            %s23 = sphi 0, %s27
            %p24 = scmp.ge.s32.totalorder %s23, 1
            %s28 = sphi %s0, %s0
            %s29 = sphi [#allocation1], [#allocation1]
          $region27: #{custom-call.10} parent=23 // loop_header_branch
            %26 = sbr.rel (%p24) target = $region31
          $region28: #{custom-call.10} parent=23 // loop_body
            %v30 = vld [vmem:[%s28] sm:$0x3]
            %31 = vst [vmem:[%s29] sm:$0x3] %v30
          $region29: #{custom-call.10} parent=23 // loop_footer
            %s27 = sadd.s32 1, %s23
          $region30: #{custom-call.10} parent=23 // loop_footer_branch
            %22 = sbr.rel target = $region26
          $region31: #{custom-call.10} parent=23 // loop_exit
            _
        $region24: #{custom-call.10} parent=8 // pred_fallthru
          _
      $region9: #{custom-call.10} parent=4 // pred_fallthru
        _
      // Predicated region
      $region10: #{custom-call.10} parent=4 // pred_check
        _
      $region11: #{custom-call.10} parent=4 // pred_check_branch
        %7 = sbr.rel (0) target = $region13
      $region12: #{custom-call.10} parent=4 // pred_region
        loop: start=0, step=1, limit=1
        $region14: #{custom-call.10} parent=12 // loop_pre_header
          _
        $region15: #{custom-call.10} parent=12 // loop_header
          %s10 = sphi 0, %s14
          %p11 = scmp.ge.s32.totalorder %s10, 1
          %s15 = sphi %s0, %s0
          %s16 = sphi [#allocation1], [#allocation1]
        $region16: #{custom-call.10} parent=12 // loop_header_branch
          %13 = sbr.rel (%p11) target = $region20
        $region17: #{custom-call.10} parent=12 // loop_body
          %v17 = vld [vmem:[%s15] sm:$0x3]
          %18 = vst [vmem:[%s16] sm:$0x3] %v17
        $region18: #{custom-call.10} parent=12 // loop_footer
          %s14 = sadd.s32 1, %s10
        $region19: #{custom-call.10} parent=12 // loop_footer_branch
          %9 = sbr.rel target = $region15
        $region20: #{custom-call.10} parent=12 // loop_exit
          _
      $region13: #{custom-call.10} parent=4 // pred_fallthru
        _
    $region5: #{custom-call.10} parent=1 // pred_fallthru
      _
    %32 = vnop
    %s34 = sshllo.u32 0, 2
    %v35 = vld [vmem:[#allocation1] sm:%s34]
    %36 = vst [vmem:[#allocation0] sm:%s34] %v35
    %v37 = vlaneseq
    %v38 = vand.u32 %v37, 127
    %vm39 = vcmp.lt.s32.totalorder %v38, 2
    %v40 = vlaneseq
    %v41 = vshrl.u32 %v40, 7
    %vm43 = vcmp.eq.s32.totalorder %v41, %v38
    %v44 = vld [vmem:[#allocation0] sm:$0xff]
    %v45 = vsel %vm43, %v44, 0.0
    %46 = vadd.xlane.f32.xlu0 %v45
    %v47 = vpop.xlane.xlu0 %46
    %vm48 = vcmp.ge.s32.totalorder %v41, %v38
    %vm49 = vmand %vm48, %vm39
    %v50 = vsel %vm49, %v44, 0.0
    %v51 = vrcp.pop %v47
    %v52 = vmul.f32 %v50, %v51
    %53 = vst [vmem:[#allocation4] sm:$0xff] %v52
    %v54 = vlaneseq
    %v55 = vand.u32 %v54, 127
    %v56 = vlaneseq
    %v57 = vshrl.u32 %v56, 7
    %vm59 = vcmp.eq.s32.totalorder %v55, %v57
    %v60 = vlaneseq
    %v61 = vand.u32 %v60, 127
    %vm62 = vcmp.eq.s32.totalorder %v61, 0
    %v63 = vsel %vm62, 1.0, -1.0
    %v64 = vsel %vm59, %v63, 0.0
    %s65 = scalar_lea.vmem [#allocation4], 1
    %v66 = vld [vmem:[%s65] ss:$0 sm:$0xff]
    %v67 = vxor.u32 %v66, 2147483648
    %v68 = vlaneseq
    %v69 = vand.u32 %v68, 127
    %vm70 = vcmp.eq.s32.totalorder %v69, 1
    %v71 = vmul.f32 %v67, %v64
    %72 = vadd.xlane.f32.xlu0 %v71
    %v73 = vpop.xlane.xlu0 %72
    %v74 = vsel %vm70, %v73, %v64
    %v75 = vrcp.pop %v47
    %v76 = vmul.f32 %v74, %v75
    %vm77 = vweird.f32 %v47
    %v78 = vsel %vm77, %v74, %v76
    %79 = vst [vmem:[#allocation2] sm:$0xff] %v78
    %s81 = sshllo.u32 0, 2
    %v83 = vld [vmem:[#allocation2] sm:%s81]
    %s84 = sshllo.u32 0, 2
    %85 = vst [vmem:[#allocation3] sm:%s84] %v83
    // Predicated region
    $region32: #{custom-call.10} parent=1 // pred_check
      _
    $region33: #{custom-call.10} parent=1 // pred_check_branch
      %87 = sbr.rel (0) target = $region35
    $region34: #{custom-call.10} parent=1 // pred_region
      // Predicated region
      $region36: #{custom-call.10} parent=34 // pred_check
        _
      $region37: #{custom-call.10} parent=34 // pred_check_branch
        %89 = sbr.rel target = $region39
      $region38: #{custom-call.10} parent=34 // pred_region
        // Predicated region
        $region51: #{custom-call.10} parent=38 // pred_check
          _
        $region52: #{custom-call.10} parent=38 // pred_check_branch
          %104 = sbr.rel (0) target = $region54
        $region53: #{custom-call.10} parent=38 // pred_region
          loop: start=0, step=1, limit=1
          $region55: #{custom-call.10} parent=53 // loop_pre_header
            _
          $region56: #{custom-call.10} parent=53 // loop_header
            %s107 = sphi 0, %s111
            %p108 = scmp.ge.s32.totalorder %s107, 1
            %s112 = sphi [#allocation3], [#allocation3]
            %s113 = sphi %s1, %s1
          $region57: #{custom-call.10} parent=53 // loop_header_branch
            %110 = sbr.rel (%p108) target = $region61
          $region58: #{custom-call.10} parent=53 // loop_body
            %v114 = vld [vmem:[%s112] sm:$0x3]
            %115 = vst [vmem:[%s113] sm:$0x3] %v114
          $region59: #{custom-call.10} parent=53 // loop_footer
            %s111 = sadd.s32 1, %s107
          $region60: #{custom-call.10} parent=53 // loop_footer_branch
            %106 = sbr.rel target = $region56
          $region61: #{custom-call.10} parent=53 // loop_exit
            _
        $region54: #{custom-call.10} parent=38 // pred_fallthru
          _
      $region39: #{custom-call.10} parent=34 // pred_fallthru
        _
      // Predicated region
      $region40: #{custom-call.10} parent=34 // pred_check
        _
      $region41: #{custom-call.10} parent=34 // pred_check_branch
        %91 = sbr.rel (0) target = $region43
      $region42: #{custom-call.10} parent=34 // pred_region
        loop: start=0, step=1, limit=1
        $region44: #{custom-call.10} parent=42 // loop_pre_header
          _
        $region45: #{custom-call.10} parent=42 // loop_header
          %s94 = sphi 0, %s98
          %p95 = scmp.ge.s32.totalorder %s94, 1
          %s99 = sphi [#allocation3], [#allocation3]
          %s100 = sphi %s1, %s1
        $region46: #{custom-call.10} parent=42 // loop_header_branch
          %97 = sbr.rel (%p95) target = $region50
        $region47: #{custom-call.10} parent=42 // loop_body
          %v101 = vld [vmem:[%s99] sm:$0x3]
          %102 = vst [vmem:[%s100] sm:$0x3] %v101
        $region48: #{custom-call.10} parent=42 // loop_footer
          %s98 = sadd.s32 1, %s94
        $region49: #{custom-call.10} parent=42 // loop_footer_branch
          %93 = sbr.rel target = $region45
        $region50: #{custom-call.10} parent=42 // loop_exit
          _
      $region43: #{custom-call.10} parent=34 // pred_fallthru
        _
    $region35: #{custom-call.10} parent=1 // pred_fallthru
      _
    %116 = vnop

// kernel: custom-call.9
$region0: #{custom-call.9}
  %s0 = inlined_call_operand.vmem [shape: f32[1,2,2], index: 0, kind: input, shape index: {}]
  %s1 = inlined_call_operand.vmem [shape: f32[1,2,2], index: 1, kind: output, shape index: {}]
  $region1: #{custom-call.9} parent=0
    #allocation0 [shape = 'u8[4096]{0}', space=vmem, size = 0x1000, scoped, tag = 'operand span for operand 0']
    #allocation1 [shape = 'u8[1024]{0}', space=vmem, size = 0x400, scoped, tag = 'packed  for operand 0']
    #allocation2 [shape = 'u8[4096]{0}', space=vmem, size = 0x1000, scoped, tag = 'operand span for operand 1']
    #allocation3 [shape = 'u8[1024]{0}', space=vmem, size = 0x400, scoped, tag = 'packed  for operand 1']
    #allocation4 [shape = 'f32[2,2]{1,0}', space=vmem, size = 0x1000, scoped, tag = 'rescaled input a']
    // Predicated region
    $region2: #{custom-call.9} parent=1 // pred_check
      _
    $region3: #{custom-call.9} parent=1 // pred_check_branch
      %3 = sbr.rel (0) target = $region5
    $region4: #{custom-call.9} parent=1 // pred_region
      // Predicated region
      $region6: #{custom-call.9} parent=4 // pred_check
        _
      $region7: #{custom-call.9} parent=4 // pred_check_branch
        %5 = sbr.rel target = $region9
      $region8: #{custom-call.9} parent=4 // pred_region
        // Predicated region
        $region21: #{custom-call.9} parent=8 // pred_check
          _
        $region22: #{custom-call.9} parent=8 // pred_check_branch
          %20 = sbr.rel (0) target = $region24
        $region23: #{custom-call.9} parent=8 // pred_region
          loop: start=0, step=1, limit=1
          $region25: #{custom-call.9} parent=23 // loop_pre_header
            _
          $region26: #{custom-call.9} parent=23 // loop_header
            %s23 = sphi 0, %s27
            %p24 = scmp.ge.s32.totalorder %s23, 1
            %s28 = sphi %s0, %s0
            %s29 = sphi [#allocation1], [#allocation1]
          $region27: #{custom-call.9} parent=23 // loop_header_branch
            %26 = sbr.rel (%p24) target = $region31
          $region28: #{custom-call.9} parent=23 // loop_body
            %v30 = vld [vmem:[%s28] sm:$0x3]
            %31 = vst [vmem:[%s29] sm:$0x3] %v30
          $region29: #{custom-call.9} parent=23 // loop_footer
            %s27 = sadd.s32 1, %s23
          $region30: #{custom-call.9} parent=23 // loop_footer_branch
            %22 = sbr.rel target = $region26
          $region31: #{custom-call.9} parent=23 // loop_exit
            _
        $region24: #{custom-call.9} parent=8 // pred_fallthru
          _
      $region9: #{custom-call.9} parent=4 // pred_fallthru
        _
      // Predicated region
      $region10: #{custom-call.9} parent=4 // pred_check
        _
      $region11: #{custom-call.9} parent=4 // pred_check_branch
        %7 = sbr.rel (0) target = $region13
      $region12: #{custom-call.9} parent=4 // pred_region
        loop: start=0, step=1, limit=1
        $region14: #{custom-call.9} parent=12 // loop_pre_header
          _
        $region15: #{custom-call.9} parent=12 // loop_header
          %s10 = sphi 0, %s14
          %p11 = scmp.ge.s32.totalorder %s10, 1
          %s15 = sphi %s0, %s0
          %s16 = sphi [#allocation1], [#allocation1]
        $region16: #{custom-call.9} parent=12 // loop_header_branch
          %13 = sbr.rel (%p11) target = $region20
        $region17: #{custom-call.9} parent=12 // loop_body
          %v17 = vld [vmem:[%s15] sm:$0x3]
          %18 = vst [vmem:[%s16] sm:$0x3] %v17
        $region18: #{custom-call.9} parent=12 // loop_footer
          %s14 = sadd.s32 1, %s10
        $region19: #{custom-call.9} parent=12 // loop_footer_branch
          %9 = sbr.rel target = $region15
        $region20: #{custom-call.9} parent=12 // loop_exit
          _
      $region13: #{custom-call.9} parent=4 // pred_fallthru
        _
    $region5: #{custom-call.9} parent=1 // pred_fallthru
      _
    %32 = vnop
    %s34 = sshllo.u32 0, 2
    %v35 = vld [vmem:[#allocation1] sm:%s34]
    %36 = vst [vmem:[#allocation0] sm:%s34] %v35
    %v37 = vlaneseq
    %v38 = vand.u32 %v37, 127
    %vm39 = vcmp.lt.s32.totalorder %v38, 2
    %v40 = vlaneseq
    %v41 = vshrl.u32 %v40, 7
    %vm43 = vcmp.eq.s32.totalorder %v41, %v38
    %v44 = vld [vmem:[#allocation0] sm:$0xff]
    %v45 = vsel %vm43, %v44, 0.0
    %46 = vadd.xlane.f32.xlu0 %v45
    %v47 = vpop.xlane.xlu0 %46
    %vm48 = vcmp.le.s32.totalorder %v41, %v38
    %vm49 = vmand %vm48, %vm39
    %v50 = vsel %vm49, %v44, 0.0
    %v51 = vrcp.pop %v47
    %v52 = vmul.f32 %v50, %v51
    %53 = vst [vmem:[#allocation4] sm:$0xff] %v52
    %v54 = vlaneseq
    %v55 = vand.u32 %v54, 127
    %v56 = vlaneseq
    %v57 = vshrl.u32 %v56, 7
    %vm59 = vcmp.eq.s32.totalorder %v55, %v57
    %v60 = vlaneseq
    %v61 = vand.u32 %v60, 127
    %vm62 = vcmp.eq.s32.totalorder %v61, 1
    %v63 = vsel %vm62, 1.0, -1.0
    %v64 = vsel %vm59, %v63, 0.0
    %v65 = vld [vmem:[#allocation4] ss:$0 sm:$0xff]
    %v66 = vxor.u32 %v65, 2147483648
    %v67 = vlaneseq
    %v68 = vand.u32 %v67, 127
    %vm69 = vcmp.eq.s32.totalorder %v68, 0
    %v70 = vmul.f32 %v66, %v64
    %71 = vadd.xlane.f32.xlu0 %v70
    %v72 = vpop.xlane.xlu0 %71
    %v73 = vsel %vm69, %v72, %v64
    %v74 = vrcp.pop %v47
    %v75 = vmul.f32 %v73, %v74
    %vm76 = vweird.f32 %v47
    %v77 = vsel %vm76, %v73, %v75
    %78 = vst [vmem:[#allocation2] sm:$0xff] %v77
    %s80 = sshllo.u32 0, 2
    %v82 = vld [vmem:[#allocation2] sm:%s80]
    %s83 = sshllo.u32 0, 2
    %84 = vst [vmem:[#allocation3] sm:%s83] %v82
    // Predicated region
    $region32: #{custom-call.9} parent=1 // pred_check
      _
    $region33: #{custom-call.9} parent=1 // pred_check_branch
      %86 = sbr.rel (0) target = $region35
    $region34: #{custom-call.9} parent=1 // pred_region
      // Predicated region
      $region36: #{custom-call.9} parent=34 // pred_check
        _
      $region37: #{custom-call.9} parent=34 // pred_check_branch
        %88 = sbr.rel target = $region39
      $region38: #{custom-call.9} parent=34 // pred_region
        // Predicated region
        $region51: #{custom-call.9} parent=38 // pred_check
          _
        $region52: #{custom-call.9} parent=38 // pred_check_branch
          %103 = sbr.rel (0) target = $region54
        $region53: #{custom-call.9} parent=38 // pred_region
          loop: start=0, step=1, limit=1
          $region55: #{custom-call.9} parent=53 // loop_pre_header
            _
          $region56: #{custom-call.9} parent=53 // loop_header
            %s106 = sphi 0, %s110
            %p107 = scmp.ge.s32.totalorder %s106, 1
            %s111 = sphi [#allocation3], [#allocation3]
            %s112 = sphi %s1, %s1
          $region57: #{custom-call.9} parent=53 // loop_header_branch
            %109 = sbr.rel (%p107) target = $region61
          $region58: #{custom-call.9} parent=53 // loop_body
            %v113 = vld [vmem:[%s111] sm:$0x3]
            %114 = vst [vmem:[%s112] sm:$0x3] %v113
          $region59: #{custom-call.9} parent=53 // loop_footer
            %s110 = sadd.s32 1, %s106
          $region60: #{custom-call.9} parent=53 // loop_footer_branch
            %105 = sbr.rel target = $region56
          $region61: #{custom-call.9} parent=53 // loop_exit
            _
        $region54: #{custom-call.9} parent=38 // pred_fallthru
          _
      $region39: #{custom-call.9} parent=34 // pred_fallthru
        _
      // Predicated region
      $region40: #{custom-call.9} parent=34 // pred_check
        _
      $region41: #{custom-call.9} parent=34 // pred_check_branch
        %90 = sbr.rel (0) target = $region43
      $region42: #{custom-call.9} parent=34 // pred_region
        loop: start=0, step=1, limit=1
        $region44: #{custom-call.9} parent=42 // loop_pre_header
          _
        $region45: #{custom-call.9} parent=42 // loop_header
          %s93 = sphi 0, %s97
          %p94 = scmp.ge.s32.totalorder %s93, 1
          %s98 = sphi [#allocation3], [#allocation3]
          %s99 = sphi %s1, %s1
        $region46: #{custom-call.9} parent=42 // loop_header_branch
          %96 = sbr.rel (%p94) target = $region50
        $region47: #{custom-call.9} parent=42 // loop_body
          %v100 = vld [vmem:[%s98] sm:$0x3]
          %101 = vst [vmem:[%s99] sm:$0x3] %v100
        $region48: #{custom-call.9} parent=42 // loop_footer
          %s97 = sadd.s32 1, %s93
        $region49: #{custom-call.9} parent=42 // loop_footer_branch
          %92 = sbr.rel target = $region45
        $region50: #{custom-call.9} parent=42 // loop_exit
          _
      $region43: #{custom-call.9} parent=34 // pred_fallthru
        _
    $region35: #{custom-call.9} parent=1 // pred_fallthru
      _
    %115 = vnop

// kernel: lqactiv_forward.1
$region0: #{lqactiv_forward.1}
  #allocation0 [shape = 'u32[]', space=smem, size = 0x4, offset = 0x4, fixed_abs, tag = 'smem constant byte address 0x4 - core index']
  #allocation1 [shape = 'u32[144,128]{1,0:T(1,128)}', space=vmem, size = 0x12000, scoped, tag = 'internal scratch']
  %s0 = inlined_call_operand.vmem [shape: f32[4], index: 0, kind: input, shape index: {}]
  %s1 = inlined_call_operand.vmem [shape: f32[3], index: 1, kind: input, shape index: {}]
  %s2 = inlined_call_operand.vmem [shape: f32[2,1024], index: 2, kind: input, shape index: {}]
  %s3 = inlined_call_operand.vmem [shape: f32[2,1024], index: 3, kind: output, shape index: {0}]
  %s4 = inlined_call_operand.vmem [shape: f32[1,2,128], index: 4, kind: output, shape index: {1}]
  %5 = xla_tuple %s3, %s4
  %s6 = sld [smem:[#allocation0]]
  $region38: #{lqactiv_forward.1} parent=0
    _
  %s8 = ssub.s32 1, %s6
  %s9 = scalar_select 0, %s8, %s6
  $region1: #{lqactiv_forward.1} parent=0
    #allocation2 [shape = 'u8[512]{0}', space=smem, size = 0x200, scoped, tag = 'input window, operand 0, single buffered']
    #allocation3 [shape = 's32[1]{0}', space=sflag, size = 0x4, scoped, tag = 'scoped memory for lqactiv_forward.1']
    #allocation4 [shape = 'u8[512]{0}', space=smem, size = 0x200, scoped, tag = 'input window, operand 1, single buffered']
    #allocation5 [shape = 's32[1]{0}', space=sflag, size = 0x4, scoped, tag = 'scoped memory for lqactiv_forward.1']
    %10 = vsyncpa [#allocation3], 0
    %11 = vsyncpa [#allocation5], 0
    // Predicated region
    $region2: #{lqactiv_forward.1} parent=1 // pred_check
      _
    $region3: #{lqactiv_forward.1} parent=1 // pred_check_branch
      %13 = sbr.rel (0) target = $region5
    $region4: #{lqactiv_forward.1} parent=1 // pred_region
      %s15 = ssub.s32 16, 16
      %16 = vsyncadd [#allocation3], %s15
      %s18 = sshll.u32 %s0, 4
      %s19 = int_to_ptr.vmem [resolvable:$true] %s18
      %21 = dma.vmem_to_smem %s19, 16, [#allocation2], [#allocation3]
    $region5: #{lqactiv_forward.1} parent=1 // pred_fallthru
      _
    // Predicated region
    $region6: #{lqactiv_forward.1} parent=1 // pred_check
      _
    $region7: #{lqactiv_forward.1} parent=1 // pred_check_branch
      %23 = sbr.rel (0) target = $region9
    $region8: #{lqactiv_forward.1} parent=1 // pred_region
      %s25 = ssub.s32 16, 16
      %26 = vsyncadd [#allocation5], %s25
      %s28 = sshll.u32 %s1, 4
      %s29 = int_to_ptr.vmem [resolvable:$true] %s28
      %31 = dma.vmem_to_smem %s29, 16, [#allocation4], [#allocation5]
    $region9: #{lqactiv_forward.1} parent=1 // pred_fallthru
      _
    // Predicated region
    $region10: #{lqactiv_forward.1} parent=1 // pred_check
      _
    $region11: #{lqactiv_forward.1} parent=1 // pred_check_branch
      %33 = sbr.rel (0) target = $region13
    $region12: #{lqactiv_forward.1} parent=1 // pred_region
      _
    $region13: #{lqactiv_forward.1} parent=1 // pred_fallthru
      _
    // Predicated region
    $region14: #{lqactiv_forward.1} parent=1 // pred_check
      _
    $region15: #{lqactiv_forward.1} parent=1 // pred_check_branch
      %35 = sbr.rel (0) target = $region17
    $region16: #{lqactiv_forward.1} parent=1 // pred_region
      %36 = dma.done [#allocation3], 16
    $region17: #{lqactiv_forward.1} parent=1 // pred_fallthru
      _
    // Predicated region
    $region18: #{lqactiv_forward.1} parent=1 // pred_check
      _
    $region19: #{lqactiv_forward.1} parent=1 // pred_check_branch
      %38 = sbr.rel (0) target = $region21
    $region20: #{lqactiv_forward.1} parent=1 // pred_region
      %39 = dma.done [#allocation5], 16
    $region21: #{lqactiv_forward.1} parent=1 // pred_fallthru
      _
    %40 = sfence
    %v41 = vld [vmem:[%s2] sm:$0xff]
    %v42 = vld [vmem:[%s2 + $0x8] sm:$0xff]
    %s43 = sld [smem:[#allocation2 + $0x3]]
    %v44 = vstv %s43
    %s45 = sld [smem:[#allocation4 + $0x2]]
    %v46 = vstv %s45
    %vm47 = vcmp.gt.f32.partialorder %v41, %v46
    %vm48 = vcmp.gt.f32.partialorder %v42, %v46
    %s49 = sld [smem:[#allocation2 + $0x2]]
    %v50 = vstv %s49
    %v51 = vsel %vm47, %v44, %v50
    %v52 = vsel %vm48, %v44, %v50
    %v53 = vsel %vm47, 1.0, 0.0
    %v54 = vsel %vm48, 1.0, 0.0
    %v57 = vcombine.high %v53, %v53
    %v59 = vunpack.c.l.s4 1983009808
    %v60 = vunpack.c.0.s8 %v59
    %v61 = vlaneseq
    %v62 = vshrl.u32 %v61, 7
    %v63 = vsub.s32 %v60, %v62
    %v64 = vrot.slane %v53, %v63
    %v66 = vunpack.c.l.s4 1983009808
    %v67 = vunpack.c.0.s8 %v66
    %v68 = vlaneseq
    %v69 = vshrl.u32 %v68, 7
    %v70 = vsub.s32 %v67, %v69
    %v71 = vrot.slane %v57, %v70
    %v72 = vcombine.high %v64, %v64
    %v73 = vcombine.high %v71, %v71
    %v74 = vcombine.high %v54, %v54
    %v76 = vunpack.c.l.s4 1983009808
    %v77 = vunpack.c.0.s8 %v76
    %v78 = vlaneseq
    %v79 = vshrl.u32 %v78, 7
    %v80 = vsub.s32 %v77, %v79
    %v81 = vrot.slane %v54, %v80
    %v83 = vunpack.c.l.s4 1983009808
    %v84 = vunpack.c.0.s8 %v83
    %v85 = vlaneseq
    %v86 = vshrl.u32 %v85, 7
    %v87 = vsub.s32 %v84, %v86
    %v88 = vrot.slane %v74, %v87
    %v89 = vcombine.high %v81, %v81
    %v90 = vcombine.high %v88, %v88
    %vm99 = vcmask 1041408
    %v100 = vsel %vm99, %v64, 0.0
    %v101 = vsel %vm99, %v72, 0.0
    %v102 = vadd.f32 %v100, %v101
    %v103 = vsel %vm99, %v71, 0.0
    %v104 = vadd.f32 %v102, %v103
    %v105 = vsel %vm99, %v73, 0.0
    %v106 = vadd.f32 %v104, %v105
    %v107 = vsel %vm99, %v81, 0.0
    %v108 = vadd.f32 %v106, %v107
    %v109 = vsel %vm99, %v89, 0.0
    %v110 = vadd.f32 %v108, %v109
    %v111 = vsel %vm99, %v88, 0.0
    %v112 = vadd.f32 %v110, %v111
    %v113 = vsel %vm99, %v90, 0.0
    %v114 = vadd.f32 %v112, %v113
    %115 = vadd.xlane.f32.xlu0 %v114
    %v116 = vpop.xlane.xlu0 %115
    %v117 = vrot.slane %v116, 4
    %v118 = vadd.f32 %v116, %v117
    %v119 = vrot.slane %v118, 2
    %v120 = vadd.f32 %v118, %v119
    %v121 = vrot.slane %v120, 1
    %v122 = vadd.f32 %v120, %v121
    %s123 = vtos %v122
    %v124 = vsel %vm47, %v41, 0.0
    %v125 = vsel %vm48, %v42, 0.0
    %v128 = vcombine.high %v124, %v124
    %v130 = vunpack.c.l.s4 1983009808
    %v131 = vunpack.c.0.s8 %v130
    %v132 = vlaneseq
    %v133 = vshrl.u32 %v132, 7
    %v134 = vsub.s32 %v131, %v133
    %v135 = vrot.slane %v124, %v134
    %v137 = vunpack.c.l.s4 1983009808
    %v138 = vunpack.c.0.s8 %v137
    %v139 = vlaneseq
    %v140 = vshrl.u32 %v139, 7
    %v141 = vsub.s32 %v138, %v140
    %v142 = vrot.slane %v128, %v141
    %v143 = vcombine.high %v135, %v135
    %v144 = vcombine.high %v142, %v142
    %v145 = vcombine.high %v125, %v125
    %v147 = vunpack.c.l.s4 1983009808
    %v148 = vunpack.c.0.s8 %v147
    %v149 = vlaneseq
    %v150 = vshrl.u32 %v149, 7
    %v151 = vsub.s32 %v148, %v150
    %v152 = vrot.slane %v125, %v151
    %v154 = vunpack.c.l.s4 1983009808
    %v155 = vunpack.c.0.s8 %v154
    %v156 = vlaneseq
    %v157 = vshrl.u32 %v156, 7
    %v158 = vsub.s32 %v155, %v157
    %v159 = vrot.slane %v145, %v158
    %v160 = vcombine.high %v152, %v152
    %v161 = vcombine.high %v159, %v159
    %v170 = vsel %vm99, %v135, 0.0
    %v171 = vsel %vm99, %v143, 0.0
    %v172 = vadd.f32 %v170, %v171
    %v173 = vsel %vm99, %v142, 0.0
    %v174 = vadd.f32 %v172, %v173
    %v175 = vsel %vm99, %v144, 0.0
    %v176 = vadd.f32 %v174, %v175
    %v177 = vsel %vm99, %v152, 0.0
    %v178 = vadd.f32 %v176, %v177
    %v179 = vsel %vm99, %v160, 0.0
    %v180 = vadd.f32 %v178, %v179
    %v181 = vsel %vm99, %v159, 0.0
    %v182 = vadd.f32 %v180, %v181
    %v183 = vsel %vm99, %v161, 0.0
    %v184 = vadd.f32 %v182, %v183
    %185 = vadd.xlane.f32.xlu0 %v184
    %v186 = vpop.xlane.xlu0 %185
    %v187 = vrot.slane %v186, 4
    %v188 = vadd.f32 %v186, %v187
    %v189 = vrot.slane %v188, 2
    %v190 = vadd.f32 %v188, %v189
    %v191 = vrot.slane %v190, 1
    %v192 = vadd.f32 %v190, %v191
    %s193 = vtos %v192
    %s194 = sld [smem:[#allocation4 + $0x1]]
    %v195 = vstv %s194
    %vm196 = vcmp.gt.f32.partialorder %v41, %v195
    %vm197 = vcmp.gt.f32.partialorder %v42, %v195
    %s198 = sld [smem:[#allocation2 + $0x1]]
    %v199 = vstv %s198
    %v200 = vsel %vm196, %v51, %v199
    %v201 = vsel %vm197, %v52, %v199
    %v202 = vsel %vm196, 1.0, 0.0
    %v203 = vsel %vm197, 1.0, 0.0
    %v206 = vcombine.high %v202, %v202
    %v208 = vunpack.c.l.s4 1983009808
    %v209 = vunpack.c.0.s8 %v208
    %v210 = vlaneseq
    %v211 = vshrl.u32 %v210, 7
    %v212 = vsub.s32 %v209, %v211
    %v213 = vrot.slane %v202, %v212
    %v215 = vunpack.c.l.s4 1983009808
    %v216 = vunpack.c.0.s8 %v215
    %v217 = vlaneseq
    %v218 = vshrl.u32 %v217, 7
    %v219 = vsub.s32 %v216, %v218
    %v220 = vrot.slane %v206, %v219
    %v221 = vcombine.high %v213, %v213
    %v222 = vcombine.high %v220, %v220
    %v223 = vcombine.high %v203, %v203
    %v225 = vunpack.c.l.s4 1983009808
    %v226 = vunpack.c.0.s8 %v225
    %v227 = vlaneseq
    %v228 = vshrl.u32 %v227, 7
    %v229 = vsub.s32 %v226, %v228
    %v230 = vrot.slane %v203, %v229
    %v232 = vunpack.c.l.s4 1983009808
    %v233 = vunpack.c.0.s8 %v232
    %v234 = vlaneseq
    %v235 = vshrl.u32 %v234, 7
    %v236 = vsub.s32 %v233, %v235
    %v237 = vrot.slane %v223, %v236
    %v238 = vcombine.high %v230, %v230
    %v239 = vcombine.high %v237, %v237
    %v248 = vsel %vm99, %v213, 0.0
    %v249 = vsel %vm99, %v221, 0.0
    %v250 = vadd.f32 %v248, %v249
    %v251 = vsel %vm99, %v220, 0.0
    %v252 = vadd.f32 %v250, %v251
    %v253 = vsel %vm99, %v222, 0.0
    %v254 = vadd.f32 %v252, %v253
    %v255 = vsel %vm99, %v230, 0.0
    %v256 = vadd.f32 %v254, %v255
    %v257 = vsel %vm99, %v238, 0.0
    %v258 = vadd.f32 %v256, %v257
    %v259 = vsel %vm99, %v237, 0.0
    %v260 = vadd.f32 %v258, %v259
    %v261 = vsel %vm99, %v239, 0.0
    %v262 = vadd.f32 %v260, %v261
    %263 = vadd.xlane.f32.xlu0 %v262
    %v264 = vpop.xlane.xlu0 %263
    %v265 = vrot.slane %v264, 4
    %v266 = vadd.f32 %v264, %v265
    %v267 = vrot.slane %v266, 2
    %v268 = vadd.f32 %v266, %v267
    %v269 = vrot.slane %v268, 1
    %v270 = vadd.f32 %v268, %v269
    %s271 = vtos %v270
    %v272 = vsel %vm196, %v41, 0.0
    %v273 = vsel %vm197, %v42, 0.0
    %v276 = vcombine.high %v272, %v272
    %v278 = vunpack.c.l.s4 1983009808
    %v279 = vunpack.c.0.s8 %v278
    %v280 = vlaneseq
    %v281 = vshrl.u32 %v280, 7
    %v282 = vsub.s32 %v279, %v281
    %v283 = vrot.slane %v272, %v282
    %v285 = vunpack.c.l.s4 1983009808
    %v286 = vunpack.c.0.s8 %v285
    %v287 = vlaneseq
    %v288 = vshrl.u32 %v287, 7
    %v289 = vsub.s32 %v286, %v288
    %v290 = vrot.slane %v276, %v289
    %v291 = vcombine.high %v283, %v283
    %v292 = vcombine.high %v290, %v290
    %v293 = vcombine.high %v273, %v273
    %v295 = vunpack.c.l.s4 1983009808
    %v296 = vunpack.c.0.s8 %v295
    %v297 = vlaneseq
    %v298 = vshrl.u32 %v297, 7
    %v299 = vsub.s32 %v296, %v298
    %v300 = vrot.slane %v273, %v299
    %v302 = vunpack.c.l.s4 1983009808
    %v303 = vunpack.c.0.s8 %v302
    %v304 = vlaneseq
    %v305 = vshrl.u32 %v304, 7
    %v306 = vsub.s32 %v303, %v305
    %v307 = vrot.slane %v293, %v306
    %v308 = vcombine.high %v300, %v300
    %v309 = vcombine.high %v307, %v307
    %v318 = vsel %vm99, %v283, 0.0
    %v319 = vsel %vm99, %v291, 0.0
    %v320 = vadd.f32 %v318, %v319
    %v321 = vsel %vm99, %v290, 0.0
    %v322 = vadd.f32 %v320, %v321
    %v323 = vsel %vm99, %v292, 0.0
    %v324 = vadd.f32 %v322, %v323
    %v325 = vsel %vm99, %v300, 0.0
    %v326 = vadd.f32 %v324, %v325
    %v327 = vsel %vm99, %v308, 0.0
    %v328 = vadd.f32 %v326, %v327
    %v329 = vsel %vm99, %v307, 0.0
    %v330 = vadd.f32 %v328, %v329
    %v331 = vsel %vm99, %v309, 0.0
    %v332 = vadd.f32 %v330, %v331
    %333 = vadd.xlane.f32.xlu0 %v332
    %v334 = vpop.xlane.xlu0 %333
    %v335 = vrot.slane %v334, 4
    %v336 = vadd.f32 %v334, %v335
    %v337 = vrot.slane %v336, 2
    %v338 = vadd.f32 %v336, %v337
    %v339 = vrot.slane %v338, 1
    %v340 = vadd.f32 %v338, %v339
    %s341 = vtos %v340
    %s342 = sld [smem:[#allocation4]]
    %v343 = vstv %s342
    %vm344 = vcmp.gt.f32.partialorder %v41, %v343
    %vm345 = vcmp.gt.f32.partialorder %v42, %v343
    %s346 = sld [smem:[#allocation2]]
    %v347 = vstv %s346
    %v348 = vsel %vm344, %v200, %v347
    %v349 = vsel %vm345, %v201, %v347
    %v350 = vsel %vm344, 1.0, 0.0
    %v351 = vsel %vm345, 1.0, 0.0
    %v354 = vcombine.high %v350, %v350
    %v356 = vunpack.c.l.s4 1983009808
    %v357 = vunpack.c.0.s8 %v356
    %v358 = vlaneseq
    %v359 = vshrl.u32 %v358, 7
    %v360 = vsub.s32 %v357, %v359
    %v361 = vrot.slane %v350, %v360
    %v363 = vunpack.c.l.s4 1983009808
    %v364 = vunpack.c.0.s8 %v363
    %v365 = vlaneseq
    %v366 = vshrl.u32 %v365, 7
    %v367 = vsub.s32 %v364, %v366
    %v368 = vrot.slane %v354, %v367
    %v369 = vcombine.high %v361, %v361
    %v370 = vcombine.high %v368, %v368
    %v371 = vcombine.high %v351, %v351
    %v373 = vunpack.c.l.s4 1983009808
    %v374 = vunpack.c.0.s8 %v373
    %v375 = vlaneseq
    %v376 = vshrl.u32 %v375, 7
    %v377 = vsub.s32 %v374, %v376
    %v378 = vrot.slane %v351, %v377
    %v380 = vunpack.c.l.s4 1983009808
    %v381 = vunpack.c.0.s8 %v380
    %v382 = vlaneseq
    %v383 = vshrl.u32 %v382, 7
    %v384 = vsub.s32 %v381, %v383
    %v385 = vrot.slane %v371, %v384
    %v386 = vcombine.high %v378, %v378
    %v387 = vcombine.high %v385, %v385
    %v396 = vsel %vm99, %v361, 0.0
    %v397 = vsel %vm99, %v369, 0.0
    %v398 = vadd.f32 %v396, %v397
    %v399 = vsel %vm99, %v368, 0.0
    %v400 = vadd.f32 %v398, %v399
    %v401 = vsel %vm99, %v370, 0.0
    %v402 = vadd.f32 %v400, %v401
    %v403 = vsel %vm99, %v378, 0.0
    %v404 = vadd.f32 %v402, %v403
    %v405 = vsel %vm99, %v386, 0.0
    %v406 = vadd.f32 %v404, %v405
    %v407 = vsel %vm99, %v385, 0.0
    %v408 = vadd.f32 %v406, %v407
    %v409 = vsel %vm99, %v387, 0.0
    %v410 = vadd.f32 %v408, %v409
    %411 = vadd.xlane.f32.xlu0 %v410
    %v412 = vpop.xlane.xlu0 %411
    %v413 = vrot.slane %v412, 4
    %v414 = vadd.f32 %v412, %v413
    %v415 = vrot.slane %v414, 2
    %v416 = vadd.f32 %v414, %v415
    %v417 = vrot.slane %v416, 1
    %v418 = vadd.f32 %v416, %v417
    %s419 = vtos %v418
    %v420 = vsel %vm344, %v41, 0.0
    %v421 = vsel %vm345, %v42, 0.0
    %v424 = vcombine.high %v420, %v420
    %v426 = vunpack.c.l.s4 1983009808
    %v427 = vunpack.c.0.s8 %v426
    %v428 = vlaneseq
    %v429 = vshrl.u32 %v428, 7
    %v430 = vsub.s32 %v427, %v429
    %v431 = vrot.slane %v420, %v430
    %v433 = vunpack.c.l.s4 1983009808
    %v434 = vunpack.c.0.s8 %v433
    %v435 = vlaneseq
    %v436 = vshrl.u32 %v435, 7
    %v437 = vsub.s32 %v434, %v436
    %v438 = vrot.slane %v424, %v437
    %v439 = vcombine.high %v431, %v431
    %v440 = vcombine.high %v438, %v438
    %v441 = vcombine.high %v421, %v421
    %v443 = vunpack.c.l.s4 1983009808
    %v444 = vunpack.c.0.s8 %v443
    %v445 = vlaneseq
    %v446 = vshrl.u32 %v445, 7
    %v447 = vsub.s32 %v444, %v446
    %v448 = vrot.slane %v421, %v447
    %v450 = vunpack.c.l.s4 1983009808
    %v451 = vunpack.c.0.s8 %v450
    %v452 = vlaneseq
    %v453 = vshrl.u32 %v452, 7
    %v454 = vsub.s32 %v451, %v453
    %v455 = vrot.slane %v441, %v454
    %v456 = vcombine.high %v448, %v448
    %v457 = vcombine.high %v455, %v455
    %v466 = vsel %vm99, %v431, 0.0
    %v467 = vsel %vm99, %v439, 0.0
    %v468 = vadd.f32 %v466, %v467
    %v469 = vsel %vm99, %v438, 0.0
    %v470 = vadd.f32 %v468, %v469
    %v471 = vsel %vm99, %v440, 0.0
    %v472 = vadd.f32 %v470, %v471
    %v473 = vsel %vm99, %v448, 0.0
    %v474 = vadd.f32 %v472, %v473
    %v475 = vsel %vm99, %v456, 0.0
    %v476 = vadd.f32 %v474, %v475
    %v477 = vsel %vm99, %v455, 0.0
    %v478 = vadd.f32 %v476, %v477
    %v479 = vsel %vm99, %v457, 0.0
    %v480 = vadd.f32 %v478, %v479
    %481 = vadd.xlane.f32.xlu0 %v480
    %v482 = vpop.xlane.xlu0 %481
    %v483 = vrot.slane %v482, 4
    %v484 = vadd.f32 %v482, %v483
    %v485 = vrot.slane %v484, 2
    %v486 = vadd.f32 %v484, %v485
    %v487 = vrot.slane %v486, 1
    %v488 = vadd.f32 %v486, %v487
    %s489 = vtos %v488
    %490 = vst [vmem:[%s3] sm:$0xff] %v348
    %491 = vst [vmem:[%s3 + $0x8] sm:$0xff] %v349
    %v494 = vcombine.high %v41, %v41
    %v496 = vunpack.c.l.s4 1983009808
    %v497 = vunpack.c.0.s8 %v496
    %v498 = vlaneseq
    %v499 = vshrl.u32 %v498, 7
    %v500 = vsub.s32 %v497, %v499
    %v501 = vrot.slane %v41, %v500
    %v503 = vunpack.c.l.s4 1983009808
    %v504 = vunpack.c.0.s8 %v503
    %v505 = vlaneseq
    %v506 = vshrl.u32 %v505, 7
    %v507 = vsub.s32 %v504, %v506
    %v508 = vrot.slane %v494, %v507
    %v509 = vcombine.high %v501, %v501
    %v510 = vcombine.high %v508, %v508
    %v511 = vcombine.high %v42, %v42
    %v513 = vunpack.c.l.s4 1983009808
    %v514 = vunpack.c.0.s8 %v513
    %v515 = vlaneseq
    %v516 = vshrl.u32 %v515, 7
    %v517 = vsub.s32 %v514, %v516
    %v518 = vrot.slane %v42, %v517
    %v520 = vunpack.c.l.s4 1983009808
    %v521 = vunpack.c.0.s8 %v520
    %v522 = vlaneseq
    %v523 = vshrl.u32 %v522, 7
    %v524 = vsub.s32 %v521, %v523
    %v525 = vrot.slane %v511, %v524
    %v526 = vcombine.high %v518, %v518
    %v527 = vcombine.high %v525, %v525
    %v536 = vsel %vm99, %v501, 0.0
    %v537 = vsel %vm99, %v509, 0.0
    %v538 = vadd.f32 %v536, %v537
    %v539 = vsel %vm99, %v508, 0.0
    %v540 = vadd.f32 %v538, %v539
    %v541 = vsel %vm99, %v510, 0.0
    %v542 = vadd.f32 %v540, %v541
    %v543 = vsel %vm99, %v518, 0.0
    %v544 = vadd.f32 %v542, %v543
    %v545 = vsel %vm99, %v526, 0.0
    %v546 = vadd.f32 %v544, %v545
    %v547 = vsel %vm99, %v525, 0.0
    %v548 = vadd.f32 %v546, %v547
    %v549 = vsel %vm99, %v527, 0.0
    %v550 = vadd.f32 %v548, %v549
    %551 = vadd.xlane.f32.xlu0 %v550
    %v552 = vpop.xlane.xlu0 %551
    %v553 = vrot.slane %v552, 4
    %v554 = vadd.f32 %v552, %v553
    %v555 = vrot.slane %v554, 2
    %v556 = vadd.f32 %v554, %v555
    %v557 = vrot.slane %v556, 1
    %v558 = vadd.f32 %v556, %v557
    %s559 = vtos %v558
    %v560 = vlaneseq
    %v561 = vshrl.u32 %v560, 7
    %v562 = vlaneseq
    %v563 = vand.u32 %v562, 127
    %vm564 = vcmp.eq.s32.totalorder %v561, 0
    %vm565 = vcmp.eq.s32.totalorder %v563, 0
    %vm566 = vmand %vm564, %vm565
    %v567 = vstv %s419
    %v568 = vsel %vm566, %v567, 0.0
    %v569 = vadd.f32 %v568, 0.0
    %vm570 = vcmp.eq.s32.totalorder %v561, 1
    %vm571 = vmand %vm570, %vm565
    %v572 = vstv %s489
    %v573 = vsel %vm571, %v572, 0.0
    %v574 = vadd.f32 %v569, %v573
    %vm575 = vcmp.eq.s32.totalorder %v563, 1
    %vm576 = vmand %vm564, %vm575
    %v577 = vstv %s271
    %v578 = vsel %vm576, %v577, 0.0
    %v579 = vadd.f32 %v574, %v578
    %vm580 = vmand %vm570, %vm575
    %v581 = vstv %s341
    %v582 = vsel %vm580, %v581, 0.0
    %v583 = vadd.f32 %v579, %v582
    %vm584 = vcmp.eq.s32.totalorder %v563, 2
    %vm585 = vmand %vm564, %vm584
    %v586 = vstv %s123
    %v587 = vsel %vm585, %v586, 0.0
    %v588 = vadd.f32 %v583, %v587
    %vm589 = vmand %vm570, %vm584
    %v590 = vstv %s193
    %v591 = vsel %vm589, %v590, 0.0
    %v592 = vadd.f32 %v588, %v591
    %vm593 = vcmp.eq.s32.totalorder %v563, 3
    %vm594 = vmand %vm570, %vm593
    %v595 = vstv %s559
    %v596 = vsel %vm594, %v595, 0.0
    %v597 = vadd.f32 %v592, %v596
    %598 = vst [vmem:[%s4] sm:$0x3] %v597
    // Predicated region
    $region22: #{lqactiv_forward.1} parent=1 // pred_check
      _
    $region23: #{lqactiv_forward.1} parent=1 // pred_check_branch
      %600 = sbr.rel (0) target = $region25
    $region24: #{lqactiv_forward.1} parent=1 // pred_region
      _
    $region25: #{lqactiv_forward.1} parent=1 // pred_fallthru
      _
    // Predicated region
    $region26: #{lqactiv_forward.1} parent=1 // pred_check
      _
    $region27: #{lqactiv_forward.1} parent=1 // pred_check_branch
      %602 = sbr.rel (0) target = $region29
    $region28: #{lqactiv_forward.1} parent=1 // pred_region
      _
    $region29: #{lqactiv_forward.1} parent=1 // pred_fallthru
      _
    // Predicated region
    $region30: #{lqactiv_forward.1} parent=1 // pred_check
      _
    $region31: #{lqactiv_forward.1} parent=1 // pred_check_branch
      %604 = sbr.rel (0) target = $region33
    $region32: #{lqactiv_forward.1} parent=1 // pred_region
      _
    $region33: #{lqactiv_forward.1} parent=1 // pred_fallthru
      _
    // Predicated region
    $region34: #{lqactiv_forward.1} parent=1 // pred_check
      _
    $region35: #{lqactiv_forward.1} parent=1 // pred_check_branch
      %606 = sbr.rel (0) target = $region37
    $region36: #{lqactiv_forward.1} parent=1 // pred_region
      _
    $region37: #{lqactiv_forward.1} parent=1 // pred_fallthru
      _
    %607 = vsyncpa [#allocation3], 1
    %608 = vsyncpa [#allocation5], 1

</llo_original>
